<compile_context>
chip_gen: v6e
topology: v6e:2x2x1
jax: 0.10.0
libtpu: 0.0.40
codegen_flags: <defaults>
</compile_context>

<pallas_src>
import functools
import math

import jax
import jax.numpy as jnp
from jax import lax
from jax.experimental import pallas as pl
from jax.experimental.pallas import tpu as pltpu


def mha_kernel(q_ref, k_ref, v_ref,
               wq_ref, wk_ref, wv_ref,
               bq_ref, bk_ref, bv_ref,
               o_ref,
               kproj_ref, vproj_ref,
               *, num_heads, d_model, mxu_dtype):
    # q_ref           : (1, TQ, D)  query tile for this (batch, q-tile)
    # k_ref / v_ref   : (1, S, D)   full key/value sequence for this batch
    # w*_ref          : (D, D)      pre-transposed projection weight (x @ Wt)
    # b*_ref          : (1, D)      projection bias (f32)
    # o_ref           : (1, TQ, D)  output tile
    # kproj_ref/vproj_ref : (S, D)  VMEM scratch, projected K/V cached per batch
    H = num_heads
    hd = d_model // H
    cdt = mxu_dtype
    qi = pl.program_id(1)

    # --- K/V projections: once per batch, cached across all query tiles. ---
    @pl.when(qi == 0)
    def _():
        xk = k_ref[0].astype(cdt)                                       # (S, D)
        xv = v_ref[0].astype(cdt)
        kp = jnp.dot(xk, wk_ref[...], preferred_element_type=jnp.float32) + bk_ref[...]
        vp = jnp.dot(xv, wv_ref[...], preferred_element_type=jnp.float32) + bv_ref[...]
        kproj_ref[...] = kp.astype(cdt)
        vproj_ref[...] = vp.astype(cdt)

    # --- Q projection for this tile; fold the score scale into q once. ---
    scale = 1.0 / math.sqrt(float(d_model))        # matches the PyTorch module
    xq = q_ref[0].astype(cdt)                                           # (TQ, D)
    q = (jnp.dot(xq, wq_ref[...], preferred_element_type=jnp.float32)
         + bq_ref[...]) * scale
    q = q.astype(cdt)

    # --- Per-head attention; retire each head directly into the output. ---
    # TODO(synk): emit QK^T as a head-batched dot (or interleave head h's PV
    #             with head h+1's QK^T) to improve MXU occupancy at hd < 128.
    for h in range(H):                              # static unroll over heads
        lo = h * hd
        qh = q[:, lo:lo + hd]                       # (TQ, hd)
        kh = kproj_ref[:, lo:lo + hd]               # (S, hd)
        vh = vproj_ref[:, lo:lo + hd]               # (S, hd)

        # scores[i, j] = sum_d qh[i, d] * kh[j, d]   (no in-kernel transpose)
        s = lax.dot_general(qh, kh, (((1,), (1,)), ((), ())),
                            preferred_element_type=jnp.float32)         # (TQ, S)

        # Numerically stable softmax numerator in f32; exact normalization is
        # applied AFTER the PV matmul on the (TQ, hd) result.
        m = jnp.max(s, axis=-1, keepdims=True)
        e = jnp.exp(s - m)                                               # (TQ, S) f32
        denom = jnp.sum(e, axis=-1, keepdims=True)                       # (TQ, 1)

        # Dropout(0.1) on attention weights -> identity (eval mode).
        ctx_h = jnp.dot(e.astype(cdt), vh, preferred_element_type=jnp.float32)
        ctx_h = ctx_h / denom                                            # exact
        o_ref[0, :, lo:lo + hd] = ctx_h.astype(o_ref.dtype)


def prepare_mha_params(params, *, mxu_dtype=jnp.float32):
    """One-time (weight-load time) layout/dtype prep; NOT done per call."""
    D = params["wq"].shape[0]
    return {
        "wq_t": jnp.asarray(params["wq"]).T.astype(mxu_dtype),
        "wk_t": jnp.asarray(params["wk"]).T.astype(mxu_dtype),
        "wv_t": jnp.asarray(params["wv"]).T.astype(mxu_dtype),
        "bq": jnp.asarray(params["bq"]).reshape(1, D).astype(jnp.float32),
        "bk": jnp.asarray(params["bk"]).reshape(1, D).astype(jnp.float32),
        "bv": jnp.asarray(params["bv"]).reshape(1, D).astype(jnp.float32),
    }


def multi_head_attention(query, key, value, prep, *, num_heads,
                         q_tile=None, mxu_dtype=jnp.float32):
    """query/key/value: [B, S, D] float32. Returns [B, S, D] float32."""
    B, S, D = query.shape
    assert D % num_heads == 0
    if q_tile is None:
        q_tile = min(S, 256)
    assert S % q_tile == 0, "sequence length must be divisible by the q tile"
    nq = S // q_tile

    q_spec = pl.BlockSpec((1, q_tile, D), lambda b, qi: (b, qi, 0))
    kv_spec = pl.BlockSpec((1, S, D), lambda b, qi: (b, 0, 0))   # invariant over qi
    w_spec = pl.BlockSpec((D, D), lambda b, qi: (0, 0))          # grid-invariant
    b_spec = pl.BlockSpec((1, D), lambda b, qi: (0, 0))          # grid-invariant
    o_spec = pl.BlockSpec((1, q_tile, D), lambda b, qi: (b, qi, 0))

    # Working-set-sized VMEM limit (double-buffered inputs/weights + scratch
    # + score/exp temporaries), clamped to sane bounds.
    wbytes = jnp.dtype(mxu_dtype).itemsize
    est = (2 * (q_tile * D * 4)            # q tile (double-buffered)
           + 2 * 2 * (S * D * 4)           # k, v (double-buffered)
           + 2 * 3 * (D * D * wbytes)      # weights
           + 2 * 3 * (D * 4)               # biases
           + 2 * (S * D * wbytes)          # kproj/vproj scratch
           + 2 * (q_tile * D * 4)          # output (double-buffered)
           + 4 * (q_tile * S * 4)          # score/exp temporaries
           + 4 * (q_tile * D * 4))         # q / ctx temporaries
    vmem_limit = int(min(100 * 1024 * 1024, max(32 * 1024 * 1024, 2 * est)))

    kernel = functools.partial(mha_kernel, num_heads=num_heads, d_model=D,
                               mxu_dtype=mxu_dtype)

    return pl.pallas_call(
        kernel,
        out_shape=jax.ShapeDtypeStruct((B, S, D), jnp.float32),
        grid_spec=pltpu.PrefetchScalarGridSpec(
            num_scalar_prefetch=0,
            grid=(B, nq),
            in_specs=[q_spec, kv_spec, kv_spec,
                      w_spec, w_spec, w_spec,
                      b_spec, b_spec, b_spec],
            out_specs=o_spec,
            scratch_shapes=[pltpu.VMEM((S, D), mxu_dtype),
                            pltpu.VMEM((S, D), mxu_dtype)],
        ),
        compiler_params=pltpu.CompilerParams(
            # batch axis shards across TensorCores; q-tile axis is sequential
            # so the K/V-projection scratch carry is well defined.
            dimension_semantics=("parallel", "arbitrary"),
            vmem_limit_bytes=vmem_limit),
    )(query, key, value,
      prep["wq_t"], prep["wk_t"], prep["wv_t"],
      prep["bq"], prep["bk"], prep["bv"])


def _reference(query, key, value, params, *, num_heads):
    """Pure-JAX reference mirroring the PyTorch module (eval-mode dropout)."""
    B, S, D = query.shape
    H = num_heads
    hd = D // H
    q = query @ params["wq"].T + params["bq"]
    k = key @ params["wk"].T + params["bk"]
    v = value @ params["wv"].T + params["bv"]
    q = q.reshape(B, S, H, hd).transpose(0, 2, 1, 3)
    k = k.reshape(B, S, H, hd).transpose(0, 2, 1, 3)
    v = v.reshape(B, S, H, hd).transpose(0, 2, 1, 3)
    scores = jnp.einsum("bhqd,bhkd->bhqk", q, k) / math.sqrt(D)
    attn = jax.nn.softmax(scores, axis=-1)
    ctx = jnp.einsum("bhqk,bhkd->bhqd", attn, v)
    return ctx.transpose(0, 2, 1, 3).reshape(B, S, D)


if __name__ == "__main__":
    # Small shapes consistent with the module's forward: [B, S, d_model].
    B, S, D, H = 2, 8, 32, 4

    key0 = jax.random.PRNGKey(0)
    k_q, k_k, k_v, k_wq, k_wk, k_wv, k_bq, k_bk, k_bv = jax.random.split(key0, 9)

    query = jax.random.normal(k_q, (B, S, D), dtype=jnp.float32)
    key_in = jax.random.normal(k_k, (B, S, D), dtype=jnp.float32)
    value = jax.random.normal(k_v, (B, S, D), dtype=jnp.float32)

    init_scale = 1.0 / math.sqrt(D)
    params = {
        "wq": jax.random.uniform(k_wq, (D, D), jnp.float32, -init_scale, init_scale),
        "wk": jax.random.uniform(k_wk, (D, D), jnp.float32, -init_scale, init_scale),
        "wv": jax.random.uniform(k_wv, (D, D), jnp.float32, -init_scale, init_scale),
        "bq": jax.random.uniform(k_bq, (D,), jnp.float32, -init_scale, init_scale),
        "bk": jax.random.uniform(k_bk, (D,), jnp.float32, -init_scale, init_scale),
        "bv": jax.random.uniform(k_bv, (D,), jnp.float32, -init_scale, init_scale),
    }

    ref = _reference(query, key_in, value, params, num_heads=H)

    # f32 MXU path: exact softmax normalization -> tight tolerance.
    prep_f32 = prepare_mha_params(params, mxu_dtype=jnp.float32)
    out = multi_head_attention(query, key_in, value, prep_f32, num_heads=H,
                               mxu_dtype=jnp.float32)
    out = jax.block_until_ready(out)
    assert out.shape == (B, S, D)
    assert jnp.allclose(out, ref, atol=1e-4, rtol=1e-4), "f32 mismatch vs reference"

    # bf16 MXU-operand path (f32 accumulation + f32 softmax), looser tolerance.
    prep_bf16 = prepare_mha_params(params, mxu_dtype=jnp.bfloat16)
    out_bf16 = multi_head_attention(query, key_in, value, prep_bf16, num_heads=H,
                                    mxu_dtype=jnp.bfloat16)
    out_bf16 = jax.block_until_ready(out_bf16)
    assert jnp.allclose(out_bf16, ref, atol=1e-1, rtol=1e-1), "bf16 mismatch vs reference"

    print("KERNEL_OK")
</pallas_src>

<mosaic_0001>
module attributes {stable_mosaic.version = 11 : i64} {
  func.func @mha_kernel(%arg0: i32, %arg1: i32, %arg2: memref<1x8x32xf32, #tpu.memory_space<vmem>>, %arg3: memref<1x8x32xf32, #tpu.memory_space<vmem>>, %arg4: memref<1x8x32xf32, #tpu.memory_space<vmem>>, %arg5: memref<32x32xf32, #tpu.memory_space<vmem>>, %arg6: memref<32x32xf32, #tpu.memory_space<vmem>>, %arg7: memref<32x32xf32, #tpu.memory_space<vmem>>, %arg8: memref<1x32xf32, #tpu.memory_space<vmem>>, %arg9: memref<1x32xf32, #tpu.memory_space<vmem>>, %arg10: memref<1x32xf32, #tpu.memory_space<vmem>>, %arg11: memref<1x8x32xf32, #tpu.memory_space<vmem>>, %arg12: memref<8x32xf32, #tpu.memory_space<vmem>>, %arg13: memref<8x32xf32, #tpu.memory_space<vmem>>) attributes {dimension_semantics = [#tpu.dimension_semantics<parallel>, #tpu.dimension_semantics<arbitrary>], iteration_bounds = array<i64: 2, 1>, scalar_prefetch = 0 : i64, scratch_operands = 2 : i64, tpu.core_type = #tpu.core_type<tc>, window_params = [{transform_indices = @transform_0, window_bounds = array<i64: 1, 8, 32>}, {transform_indices = @transform_1, window_bounds = array<i64: 1, 8, 32>}, {transform_indices = @transform_2, window_bounds = array<i64: 1, 8, 32>}, {pipeline_mode = #tpu.pipeline_mode<synchronous>, transform_indices = @transform_3, window_bounds = array<i64: 32, 32>}, {pipeline_mode = #tpu.pipeline_mode<synchronous>, transform_indices = @transform_4, window_bounds = array<i64: 32, 32>}, {pipeline_mode = #tpu.pipeline_mode<synchronous>, transform_indices = @transform_5, window_bounds = array<i64: 32, 32>}, {pipeline_mode = #tpu.pipeline_mode<synchronous>, transform_indices = @transform_6, window_bounds = array<i64: 1, 32>}, {pipeline_mode = #tpu.pipeline_mode<synchronous>, transform_indices = @transform_7, window_bounds = array<i64: 1, 32>}, {pipeline_mode = #tpu.pipeline_mode<synchronous>, transform_indices = @transform_8, window_bounds = array<i64: 1, 32>}, {transform_indices = @transform_9, window_bounds = array<i64: 1, 8, 32>}]} {
    %c0_i32 = arith.constant 0 : i32
    %0 = arith.cmpi eq, %arg1, %c0_i32 : i32
    %1 = arith.extui %0 : i1 to i32
    %c0_i32_0 = arith.constant 0 : i32
    %2 = arith.cmpi ne, %1, %c0_i32_0 : i32
    scf.if %2 {
      %c0_49 = arith.constant 0 : index
      %c0_50 = arith.constant 0 : index
      %c0_51 = arith.constant 0 : index
      %80 = vector.load %arg3[%c0_49, %c0_50, %c0_51] : memref<1x8x32xf32, #tpu.memory_space<vmem>>, vector<1x8x32xf32>
      %81 = vector.shape_cast %80 : vector<1x8x32xf32> to vector<8x32xf32>
      %c0_52 = arith.constant 0 : index
      %c0_53 = arith.constant 0 : index
      %c0_54 = arith.constant 0 : index
      %82 = vector.load %arg4[%c0_52, %c0_53, %c0_54] : memref<1x8x32xf32, #tpu.memory_space<vmem>>, vector<1x8x32xf32>
      %83 = vector.shape_cast %82 : vector<1x8x32xf32> to vector<8x32xf32>
      %c0_55 = arith.constant 0 : index
      %c0_56 = arith.constant 0 : index
      %84 = vector.load %arg6[%c0_55, %c0_56] : memref<32x32xf32, #tpu.memory_space<vmem>>, vector<32x32xf32>
      %cst_57 = arith.constant dense<0.000000e+00> : vector<8x32xf32>
      %85 = tpu.matmul %81, %84, %cst_57 {dimension_numbers = #tpu.dot_dimension_numbers<[1], [0], [0], [1], [0, 0, 1, 1], [], []>} : vector<8x32xf32>, vector<32x32xf32>, vector<8x32xf32> -> vector<8x32xf32>
      %c0_58 = arith.constant 0 : index
      %c0_59 = arith.constant 0 : index
      %86 = vector.load %arg9[%c0_58, %c0_59] : memref<1x32xf32, #tpu.memory_space<vmem>>, vector<1x32xf32>
      %87 = vector.broadcast %86 : vector<1x32xf32> to vector<8x32xf32>
      %88 = arith.addf %85, %87 : vector<8x32xf32>
      %c0_60 = arith.constant 0 : index
      %c0_61 = arith.constant 0 : index
      %89 = vector.load %arg7[%c0_60, %c0_61] : memref<32x32xf32, #tpu.memory_space<vmem>>, vector<32x32xf32>
      %cst_62 = arith.constant dense<0.000000e+00> : vector<8x32xf32>
      %90 = tpu.matmul %83, %89, %cst_62 {dimension_numbers = #tpu.dot_dimension_numbers<[1], [0], [0], [1], [0, 0, 1, 1], [], []>} : vector<8x32xf32>, vector<32x32xf32>, vector<8x32xf32> -> vector<8x32xf32>
      %c0_63 = arith.constant 0 : index
      %c0_64 = arith.constant 0 : index
      %91 = vector.load %arg10[%c0_63, %c0_64] : memref<1x32xf32, #tpu.memory_space<vmem>>, vector<1x32xf32>
      %92 = vector.broadcast %91 : vector<1x32xf32> to vector<8x32xf32>
      %93 = arith.addf %90, %92 : vector<8x32xf32>
      %c0_65 = arith.constant 0 : index
      %c0_66 = arith.constant 0 : index
      %94 = vector.load %arg12[%c0_65, %c0_66] : memref<8x32xf32, #tpu.memory_space<vmem>>, vector<8x32xf32>
      tpu.vector_store %arg12[%c0_65, %c0_66], %88 {strides = array<i32>} : memref<8x32xf32, #tpu.memory_space<vmem>>, vector<8x32xf32>,
      %c0_67 = arith.constant 0 : index
      %c0_68 = arith.constant 0 : index
      %95 = vector.load %arg13[%c0_67, %c0_68] : memref<8x32xf32, #tpu.memory_space<vmem>>, vector<8x32xf32>
      tpu.vector_store %arg13[%c0_67, %c0_68], %93 {strides = array<i32>} : memref<8x32xf32, #tpu.memory_space<vmem>>, vector<8x32xf32>,
    } else {
    }
    %c0 = arith.constant 0 : index
    %c0_1 = arith.constant 0 : index
    %c0_2 = arith.constant 0 : index
    %3 = vector.load %arg2[%c0, %c0_1, %c0_2] : memref<1x8x32xf32, #tpu.memory_space<vmem>>, vector<1x8x32xf32>
    %4 = vector.shape_cast %3 : vector<1x8x32xf32> to vector<8x32xf32>
    %c0_3 = arith.constant 0 : index
    %c0_4 = arith.constant 0 : index
    %5 = vector.load %arg5[%c0_3, %c0_4] : memref<32x32xf32, #tpu.memory_space<vmem>>, vector<32x32xf32>
    %cst = arith.constant dense<0.000000e+00> : vector<8x32xf32>
    %6 = tpu.matmul %4, %5, %cst {dimension_numbers = #tpu.dot_dimension_numbers<[1], [0], [0], [1], [0, 0, 1, 1], [], []>} : vector<8x32xf32>, vector<32x32xf32>, vector<8x32xf32> -> vector<8x32xf32>
    %c0_5 = arith.constant 0 : index
    %c0_6 = arith.constant 0 : index
    %7 = vector.load %arg8[%c0_5, %c0_6] : memref<1x32xf32, #tpu.memory_space<vmem>>, vector<1x32xf32>
    %8 = vector.broadcast %7 : vector<1x32xf32> to vector<8x32xf32>
    %9 = arith.addf %6, %8 : vector<8x32xf32>
    %cst_7 = arith.constant 0.176776692 : f32
    %10 = vector.broadcast %cst_7 : f32 to vector<8x32xf32>
    %11 = arith.mulf %9, %10 : vector<8x32xf32>
    %12 = vector.extract_strided_slice %11 {offsets = [0, 0], sizes = [8, 8], strides = [1, 1]} : vector<8x32xf32> to vector<8x8xf32>
    %c0_8 = arith.constant 0 : index
    %c0_9 = arith.constant 0 : index
    %13 = vector.load %arg12[%c0_8, %c0_9] : memref<8x32xf32, #tpu.memory_space<vmem>>, vector<8x8xf32>
    %c0_10 = arith.constant 0 : index
    %c0_11 = arith.constant 0 : index
    %14 = vector.load %arg13[%c0_10, %c0_11] : memref<8x32xf32, #tpu.memory_space<vmem>>, vector<8x8xf32>
    %cst_12 = arith.constant dense<0.000000e+00> : vector<8x8xf32>
    %15 = tpu.matmul %12, %13, %cst_12 {dimension_numbers = #tpu.dot_dimension_numbers<[1], [1], [0], [0], [0, 0, 1, 0], [], []>} : vector<8x8xf32>, vector<8x8xf32>, vector<8x8xf32> -> vector<8x8xf32>
    %cst_13 = arith.constant dense<0xFF800000> : vector<8xf32>
    %16 = vector.multi_reduction <maximumf>, %15, %cst_13 [1] : vector<8x8xf32> to vector<8xf32>
    %17 = vector.shape_cast %16 : vector<8xf32> to vector<8x1xf32>
    %18 = vector.broadcast %17 : vector<8x1xf32> to vector<8x8xf32>
    %19 = arith.subf %15, %18 : vector<8x8xf32>
    %20 = math.exp %19 : vector<8x8xf32>
    %cst_14 = arith.constant dense<0.000000e+00> : vector<8xf32>
    %21 = vector.multi_reduction <add>, %20, %cst_14 [1] : vector<8x8xf32> to vector<8xf32>
    %22 = vector.shape_cast %21 : vector<8xf32> to vector<8x1xf32>
    %cst_15 = arith.constant dense<0.000000e+00> : vector<8x8xf32>
    %23 = tpu.matmul %20, %14, %cst_15 {dimension_numbers = #tpu.dot_dimension_numbers<[1], [0], [0], [1], [0, 0, 1, 1], [], []>} : vector<8x8xf32>, vector<8x8xf32>, vector<8x8xf32> -> vector<8x8xf32>
    %24 = vector.broadcast %22 : vector<8x1xf32> to vector<8x8xf32>
    %25 = arith.divf %23, %24 : vector<8x8xf32>
    %c0_16 = arith.constant 0 : index
    %c0_17 = arith.constant 0 : index
    %c0_18 = arith.constant 0 : index
    %26 = vector.load %arg11[%c0_16, %c0_17, %c0_18] : memref<1x8x32xf32, #tpu.memory_space<vmem>>, vector<1x8x8xf32>
    %27 = vector.shape_cast %26 : vector<1x8x8xf32> to vector<8x8xf32>
    %28 = vector.shape_cast %25 : vector<8x8xf32> to vector<1x8x8xf32>
    tpu.vector_store %arg11[%c0_16, %c0_17, %c0_18], %28 {strides = array<i32>} : memref<1x8x32xf32, #tpu.memory_space<vmem>>, vector<1x8x8xf32>,
    %29 = vector.extract_strided_slice %11 {offsets = [0, 8], sizes = [8, 8], strides = [1, 1]} : vector<8x32xf32> to vector<8x8xf32>
    %c0_19 = arith.constant 0 : index
    %c8 = arith.constant 8 : index
    %30 = vector.load %arg12[%c0_19, %c8] : memref<8x32xf32, #tpu.memory_space<vmem>>, vector<8x8xf32>
    %c0_20 = arith.constant 0 : index
    %c8_21 = arith.constant 8 : index
    %31 = vector.load %arg13[%c0_20, %c8_21] : memref<8x32xf32, #tpu.memory_space<vmem>>, vector<8x8xf32>
    %cst_22 = arith.constant dense<0.000000e+00> : vector<8x8xf32>
    %32 = tpu.matmul %29, %30, %cst_22 {dimension_numbers = #tpu.dot_dimension_numbers<[1], [1], [0], [0], [0, 0, 1, 0], [], []>} : vector<8x8xf32>, vector<8x8xf32>, vector<8x8xf32> -> vector<8x8xf32>
    %cst_23 = arith.constant dense<0xFF800000> : vector<8xf32>
    %33 = vector.multi_reduction <maximumf>, %32, %cst_23 [1] : vector<8x8xf32> to vector<8xf32>
    %34 = vector.shape_cast %33 : vector<8xf32> to vector<8x1xf32>
    %35 = vector.broadcast %34 : vector<8x1xf32> to vector<8x8xf32>
    %36 = arith.subf %32, %35 : vector<8x8xf32>
    %37 = math.exp %36 : vector<8x8xf32>
    %cst_24 = arith.constant dense<0.000000e+00> : vector<8xf32>
    %38 = vector.multi_reduction <add>, %37, %cst_24 [1] : vector<8x8xf32> to vector<8xf32>
    %39 = vector.shape_cast %38 : vector<8xf32> to vector<8x1xf32>
    %cst_25 = arith.constant dense<0.000000e+00> : vector<8x8xf32>
    %40 = tpu.matmul %37, %31, %cst_25 {dimension_numbers = #tpu.dot_dimension_numbers<[1], [0], [0], [1], [0, 0, 1, 1], [], []>} : vector<8x8xf32>, vector<8x8xf32>, vector<8x8xf32> -> vector<8x8xf32>
    %41 = vector.broadcast %39 : vector<8x1xf32> to vector<8x8xf32>
    %42 = arith.divf %40, %41 : vector<8x8xf32>
    %c0_26 = arith.constant 0 : index
    %c0_27 = arith.constant 0 : index
    %c8_28 = arith.constant 8 : index
    %43 = vector.load %arg11[%c0_26, %c0_27, %c8_28] : memref<1x8x32xf32, #tpu.memory_space<vmem>>, vector<1x8x8xf32>
    %44 = vector.shape_cast %43 : vector<1x8x8xf32> to vector<8x8xf32>
    %45 = vector.shape_cast %42 : vector<8x8xf32> to vector<1x8x8xf32>
    tpu.vector_store %arg11[%c0_26, %c0_27, %c8_28], %45 {strides = array<i32>} : memref<1x8x32xf32, #tpu.memory_space<vmem>>, vector<1x8x8xf32>,
    %46 = vector.extract_strided_slice %11 {offsets = [0, 16], sizes = [8, 8], strides = [1, 1]} : vector<8x32xf32> to vector<8x8xf32>
    %c0_29 = arith.constant 0 : index
    %c16 = arith.constant 16 : index
    %47 = vector.load %arg12[%c0_29, %c16] : memref<8x32xf32, #tpu.memory_space<vmem>>, vector<8x8xf32>
    %c0_30 = arith.constant 0 : index
    %c16_31 = arith.constant 16 : index
    %48 = vector.load %arg13[%c0_30, %c16_31] : memref<8x32xf32, #tpu.memory_space<vmem>>, vector<8x8xf32>
    %cst_32 = arith.constant dense<0.000000e+00> : vector<8x8xf32>
    %49 = tpu.matmul %46, %47, %cst_32 {dimension_numbers = #tpu.dot_dimension_numbers<[1], [1], [0], [0], [0, 0, 1, 0], [], []>} : vector<8x8xf32>, vector<8x8xf32>, vector<8x8xf32> -> vector<8x8xf32>
    %cst_33 = arith.constant dense<0xFF800000> : vector<8xf32>
    %50 = vector.multi_reduction <maximumf>, %49, %cst_33 [1] : vector<8x8xf32> to vector<8xf32>
    %51 = vector.shape_cast %50 : vector<8xf32> to vector<8x1xf32>
    %52 = vector.broadcast %51 : vector<8x1xf32> to vector<8x8xf32>
    %53 = arith.subf %49, %52 : vector<8x8xf32>
    %54 = math.exp %53 : vector<8x8xf32>
    %cst_34 = arith.constant dense<0.000000e+00> : vector<8xf32>
    %55 = vector.multi_reduction <add>, %54, %cst_34 [1] : vector<8x8xf32> to vector<8xf32>
    %56 = vector.shape_cast %55 : vector<8xf32> to vector<8x1xf32>
    %cst_35 = arith.constant dense<0.000000e+00> : vector<8x8xf32>
    %57 = tpu.matmul %54, %48, %cst_35 {dimension_numbers = #tpu.dot_dimension_numbers<[1], [0], [0], [1], [0, 0, 1, 1], [], []>} : vector<8x8xf32>, vector<8x8xf32>, vector<8x8xf32> -> vector<8x8xf32>
    %58 = vector.broadcast %56 : vector<8x1xf32> to vector<8x8xf32>
    %59 = arith.divf %57, %58 : vector<8x8xf32>
    %c0_36 = arith.constant 0 : index
    %c0_37 = arith.constant 0 : index
    %c16_38 = arith.constant 16 : index
    %60 = vector.load %arg11[%c0_36, %c0_37, %c16_38] : memref<1x8x32xf32, #tpu.memory_space<vmem>>, vector<1x8x8xf32>
    %61 = vector.shape_cast %60 : vector<1x8x8xf32> to vector<8x8xf32>
    %62 = vector.shape_cast %59 : vector<8x8xf32> to vector<1x8x8xf32>
    tpu.vector_store %arg11[%c0_36, %c0_37, %c16_38], %62 {strides = array<i32>} : memref<1x8x32xf32, #tpu.memory_space<vmem>>, vector<1x8x8xf32>,
    %63 = vector.extract_strided_slice %11 {offsets = [0, 24], sizes = [8, 8], strides = [1, 1]} : vector<8x32xf32> to vector<8x8xf32>
    %c0_39 = arith.constant 0 : index
    %c24 = arith.constant 24 : index
    %64 = vector.load %arg12[%c0_39, %c24] : memref<8x32xf32, #tpu.memory_space<vmem>>, vector<8x8xf32>
    %c0_40 = arith.constant 0 : index
    %c24_41 = arith.constant 24 : index
    %65 = vector.load %arg13[%c0_40, %c24_41] : memref<8x32xf32, #tpu.memory_space<vmem>>, vector<8x8xf32>
    %cst_42 = arith.constant dense<0.000000e+00> : vector<8x8xf32>
    %66 = tpu.matmul %63, %64, %cst_42 {dimension_numbers = #tpu.dot_dimension_numbers<[1], [1], [0], [0], [0, 0, 1, 0], [], []>} : vector<8x8xf32>, vector<8x8xf32>, vector<8x8xf32> -> vector<8x8xf32>
    %cst_43 = arith.constant dense<0xFF800000> : vector<8xf32>
    %67 = vector.multi_reduction <maximumf>, %66, %cst_43 [1] : vector<8x8xf32> to vector<8xf32>
    %68 = vector.shape_cast %67 : vector<8xf32> to vector<8x1xf32>
    %69 = vector.broadcast %68 : vector<8x1xf32> to vector<8x8xf32>
    %70 = arith.subf %66, %69 : vector<8x8xf32>
    %71 = math.exp %70 : vector<8x8xf32>
    %cst_44 = arith.constant dense<0.000000e+00> : vector<8xf32>
    %72 = vector.multi_reduction <add>, %71, %cst_44 [1] : vector<8x8xf32> to vector<8xf32>
    %73 = vector.shape_cast %72 : vector<8xf32> to vector<8x1xf32>
    %cst_45 = arith.constant dense<0.000000e+00> : vector<8x8xf32>
    %74 = tpu.matmul %71, %65, %cst_45 {dimension_numbers = #tpu.dot_dimension_numbers<[1], [0], [0], [1], [0, 0, 1, 1], [], []>} : vector<8x8xf32>, vector<8x8xf32>, vector<8x8xf32> -> vector<8x8xf32>
    %75 = vector.broadcast %73 : vector<8x1xf32> to vector<8x8xf32>
    %76 = arith.divf %74, %75 : vector<8x8xf32>
    %c0_46 = arith.constant 0 : index
    %c0_47 = arith.constant 0 : index
    %c24_48 = arith.constant 24 : index
    %77 = vector.load %arg11[%c0_46, %c0_47, %c24_48] : memref<1x8x32xf32, #tpu.memory_space<vmem>>, vector<1x8x8xf32>
    %78 = vector.shape_cast %77 : vector<1x8x8xf32> to vector<8x8xf32>
    %79 = vector.shape_cast %76 : vector<8x8xf32> to vector<1x8x8xf32>
    tpu.vector_store %arg11[%c0_46, %c0_47, %c24_48], %79 {strides = array<i32>} : memref<1x8x32xf32, #tpu.memory_space<vmem>>, vector<1x8x8xf32>,
    return
  }
  func.func @transform_0(%arg0: i32, %arg1: i32) -> (i32, i32, i32) {
    %c0_i32 = arith.constant 0 : i32
    %c0_i32_0 = arith.constant 0 : i32
    return %arg0, %arg1, %c0_i32 : i32, i32, i32
  }
  func.func @transform_1(%arg0: i32, %arg1: i32) -> (i32, i32, i32) {
    %c0_i32 = arith.constant 0 : i32
    %c0_i32_0 = arith.constant 0 : i32
    %c0_i32_1 = arith.constant 0 : i32
    return %arg0, %c0_i32, %c0_i32_0 : i32, i32, i32
  }
  func.func @transform_2(%arg0: i32, %arg1: i32) -> (i32, i32, i32) {
    %c0_i32 = arith.constant 0 : i32
    %c0_i32_0 = arith.constant 0 : i32
    %c0_i32_1 = arith.constant 0 : i32
    return %arg0, %c0_i32, %c0_i32_0 : i32, i32, i32
  }
  func.func @transform_3(%arg0: i32, %arg1: i32) -> (i32, i32) {
    %c0_i32 = arith.constant 0 : i32
    %c0_i32_0 = arith.constant 0 : i32
    %c0_i32_1 = arith.constant 0 : i32
    return %c0_i32, %c0_i32_0 : i32, i32
  }
  func.func @transform_4(%arg0: i32, %arg1: i32) -> (i32, i32) {
    %c0_i32 = arith.constant 0 : i32
    %c0_i32_0 = arith.constant 0 : i32
    %c0_i32_1 = arith.constant 0 : i32
    return %c0_i32, %c0_i32_0 : i32, i32
  }
  func.func @transform_5(%arg0: i32, %arg1: i32) -> (i32, i32) {
    %c0_i32 = arith.constant 0 : i32
    %c0_i32_0 = arith.constant 0 : i32
    %c0_i32_1 = arith.constant 0 : i32
    return %c0_i32, %c0_i32_0 : i32, i32
  }
  func.func @transform_6(%arg0: i32, %arg1: i32) -> (i32, i32) {
    %c0_i32 = arith.constant 0 : i32
    %c0_i32_0 = arith.constant 0 : i32
    %c0_i32_1 = arith.constant 0 : i32
    return %c0_i32, %c0_i32_0 : i32, i32
  }
  func.func @transform_7(%arg0: i32, %arg1: i32) -> (i32, i32) {
    %c0_i32 = arith.constant 0 : i32
    %c0_i32_0 = arith.constant 0 : i32
    %c0_i32_1 = arith.constant 0 : i32
    return %c0_i32, %c0_i32_0 : i32, i32
  }
  func.func @transform_8(%arg0: i32, %arg1: i32) -> (i32, i32) {
    %c0_i32 = arith.constant 0 : i32
    %c0_i32_0 = arith.constant 0 : i32
    %c0_i32_1 = arith.constant 0 : i32
    return %c0_i32, %c0_i32_0 : i32, i32
  }
  func.func @transform_9(%arg0: i32, %arg1: i32) -> (i32, i32, i32) {
    %c0_i32 = arith.constant 0 : i32
    %c0_i32_0 = arith.constant 0 : i32
    return %arg0, %arg1, %c0_i32 : i32, i32, i32
  }
}

</mosaic_0001>

<llo_original>
// kernel: tpu_custom_call.1
$region0: #{tpu_custom_call.1}
  #allocation0 [shape = 'u32[]', space=smem, size = 0x4, offset = 0x4, fixed_abs, tag = 'smem constant byte address 0x4 - core index']
  #allocation1 [shape = 'u32[144,128]{1,0:T(1,128)}', space=vmem, size = 0x12000, scoped, tag = 'internal scratch']
  #allocation2 [shape = 'f32[8,32]{1,0:T(8,128)}', space=vmem, size = 0x1000, scoped, tag = 'scratch operand']
  #allocation3 [shape = 'f32[8,32]{1,0:T(8,128)}', space=vmem, size = 0x1000, scoped, tag = 'scratch operand']
  %s0 = inlined_call_operand.hbm [shape: f32[2,8,32], index: 0, kind: input, shape index: {}]
  %s1 = inlined_call_operand.hbm [shape: f32[2,8,32], index: 1, kind: input, shape index: {}]
  %s2 = inlined_call_operand.hbm [shape: f32[2,8,32], index: 2, kind: input, shape index: {}]
  %s3 = inlined_call_operand.hbm [shape: f32[32,32], index: 3, kind: input, shape index: {}]
  %s4 = inlined_call_operand.hbm [shape: f32[32,32], index: 4, kind: input, shape index: {}]
  %s5 = inlined_call_operand.hbm [shape: f32[32,32], index: 5, kind: input, shape index: {}]
  %s6 = inlined_call_operand.vmem [shape: f32[1,32], index: 6, kind: input, shape index: {}]
  %s7 = inlined_call_operand.vmem [shape: f32[1,32], index: 7, kind: input, shape index: {}]
  %s8 = inlined_call_operand.vmem [shape: f32[1,32], index: 8, kind: input, shape index: {}]
  %s9 = inlined_call_operand.hbm [shape: f32[2,8,32], index: 9, kind: output, shape index: {}]
  %s10 = sld [smem:[#allocation0]]
  $region97: #{tpu_custom_call.1} parent=0
    _
  %s12 = ssub.s32 1, %s10
  %s13 = scalar_select 0, %s12, %s10
  $region1: #{tpu_custom_call.1} parent=0
    #allocation4 [shape = 'u8[8192]{0}', space=vmem, size = 0x2000, scoped, tag = 'input window, operand 0']
    #allocation5 [shape = 's32[2]{0}', space=sflag, size = 0x8, scoped, tag = 'scoped memory for tpu_custom_call.1']
    #allocation6 [shape = 's32[2]{0}', space=sflag, size = 0x8, scoped, tag = 'scoped memory for tpu_custom_call.1']
    #allocation7 [shape = 'u8[8192]{0}', space=vmem, size = 0x2000, scoped, tag = 'input window, operand 1']
    #allocation8 [shape = 's32[2]{0}', space=sflag, size = 0x8, scoped, tag = 'scoped memory for tpu_custom_call.1']
    #allocation9 [shape = 'u8[8192]{0}', space=vmem, size = 0x2000, scoped, tag = 'input window, operand 2']
    #allocation10 [shape = 'u8[16384]{0}', space=vmem, size = 0x4000, scoped, tag = 'input window, operand 3, single buffered']
    #allocation11 [shape = 's32[1]{0}', space=sflag, size = 0x4, scoped, tag = 'scoped memory for tpu_custom_call.1']
    #allocation12 [shape = 'u8[16384]{0}', space=vmem, size = 0x4000, scoped, tag = 'input window, operand 4, single buffered']
    #allocation13 [shape = 'u8[16384]{0}', space=vmem, size = 0x4000, scoped, tag = 'input window, operand 5, single buffered']
    #allocation14 [shape = 's32[1]{0}', space=sflag, size = 0x4, scoped, tag = 'scoped memory for tpu_custom_call.1']
    #allocation15 [shape = 'u8[8192]{0}', space=vmem, size = 0x2000, scoped, tag = 'output window, operand 0']
    %14 = vsyncpa [#allocation5], 0
    %s15 = scalar_lea.sflag [#allocation5], 1
    %16 = vsyncpa %s15, 0
    %17 = vsyncpa [#allocation8], 0
    %s18 = scalar_lea.sflag [#allocation8], 1
    %19 = vsyncpa %s18, 0
    %20 = vsyncpa [#allocation11], 0
    %21 = vsyncpa [#allocation14], 0
    %22 = vsyncpa [#allocation6], 0
    %s23 = scalar_lea.sflag [#allocation6], 1
    %24 = vsyncpa %s23, 0
    loop: start=0, step=1, limit=4
    $region2: #{tpu_custom_call.1} parent=1 // loop_pre_header
      _
    $region3: #{tpu_custom_call.1} parent=1 // loop_header
      %s26 = sphi 0, %s30
      %p27 = scmp.ge.s32.totalorder %s26, 4
      %s33 = sphi 0, %s45
      %s34 = sphi 0, %s41
      %s35 = sphi 0, %s33
      %s36 = sphi 0, %s34
      %s37 = sphi 0, %s35
      %s38 = sphi 0, %s36
      %s50 = sphi 0, %s52
      %s53 = sphi 0, %s50
      %s54 = sphi 0, %s53
      %s70 = sphi 0, %s54
      %s76 = sphi 0, %s78
      %s79 = sphi 0, %s76
      %s80 = sphi 0, %s79
      %s96 = sphi 0, %s80
      %s102 = sphi 0, %s104
      %s105 = sphi 0, %s102
      %s106 = sphi 0, %s105
      %s122 = sphi 0, %s106
      %s126 = sphi 0, %s126
      %s128 = sphi 0, %s126
      %s129 = sphi 0, %s128
      %s143 = sphi 0, %s129
      %s147 = sphi 0, %s147
      %s149 = sphi 0, %s147
      %s150 = sphi 0, %s149
      %s164 = sphi 0, %s150
      %s168 = sphi 0, %s168
      %s170 = sphi 0, %s168
      %s171 = sphi 0, %s170
      %s185 = sphi 0, %s171
      %s189 = sphi 0, %s189
      %s191 = sphi 0, %s189
      %s192 = sphi 0, %s191
      %s206 = sphi 0, %s192
      %s210 = sphi 0, %s210
      %s212 = sphi 0, %s210
      %s213 = sphi 0, %s212
      %s227 = sphi 0, %s213
      %s231 = sphi 0, %s231
      %s233 = sphi 0, %s231
      %s234 = sphi 0, %s233
      %s248 = sphi 0, %s234
      %s256 = sphi 0, %s258
      %s259 = sphi 0, %s256
      %s260 = sphi 0, %s259
      %s276 = sphi 0, %s260
    $region4: #{tpu_custom_call.1} parent=1 // loop_header_branch
      %29 = sbr.rel (%p27) target = $region8
    $region5: #{tpu_custom_call.1} parent=1 // loop_body
      %s31 = ssub.s32 %s26, 1
      %s32 = ssub.s32 %s26, 2
      %s39 = sadd.s32 1, %s34
      %p40 = scmp.ge.s32.totalorder %s39, 1
      %s41 = scalar_select %p40, 0, %s39
      %s42 = sadd.s32 1, %s33
      %s43 = scalar_select %p40, %s42, %s33
      %p44 = scmp.ge.s32.totalorder %s43, 2
      %s45 = scalar_select %p44, 0, %s43
      %s46 = ssub.s32 %s33, %s45
      %s47 = ssub.s32 %s34, %s41
      %s48 = sor.u32 %s46, %s47
      %p49 = scmp.eq.s32.totalorder %s48, 0
      %s51 = sadd.s32 %s50, 1
      %s52 = scalar_select %p49, %s50, %s51
      %p55 = pneg %p49
      %p56 = scmp.eq.s32.totalorder %s26, 1
      %p57 = por %p55, %p56
      %p58 = scmp.ne.s32.totalorder %s50, %s53
      %p59 = scmp.eq.s32.totalorder %s26, 0
      %p60 = por %p58, %p59
      %p61 = scmp.ne.s32.totalorder %s50, %s53
      %p62 = scmp.eq.s32.totalorder %s31, 1
      %p63 = por %p61, %p62
      %p64 = scmp.ne.s32.totalorder %s53, %s54
      %p65 = scmp.eq.s32.totalorder %s31, 0
      %p66 = por %p64, %p65
      %p67 = scmp.ne.s32.totalorder %s53, %s54
      %p68 = scmp.eq.s32.totalorder %s32, 1
      %p69 = por %p67, %p68
      %p71 = scmp.ne.s32.totalorder %s54, %s70
      %p72 = scmp.eq.s32.totalorder %s32, 0
      %p73 = por %p71, %p72
      %s74 = ssub.s32 %s33, %s45
      %p75 = scmp.eq.s32.totalorder %s74, 0
      %s77 = sadd.s32 %s76, 1
      %s78 = scalar_select %p75, %s76, %s77
      %p81 = pneg %p75
      %p82 = scmp.eq.s32.totalorder %s26, 1
      %p83 = por %p81, %p82
      %p84 = scmp.ne.s32.totalorder %s76, %s79
      %p85 = scmp.eq.s32.totalorder %s26, 0
      %p86 = por %p84, %p85
      %p87 = scmp.ne.s32.totalorder %s76, %s79
      %p88 = scmp.eq.s32.totalorder %s31, 1
      %p89 = por %p87, %p88
      %p90 = scmp.ne.s32.totalorder %s79, %s80
      %p91 = scmp.eq.s32.totalorder %s31, 0
      %p92 = por %p90, %p91
      %p93 = scmp.ne.s32.totalorder %s79, %s80
      %p94 = scmp.eq.s32.totalorder %s32, 1
      %p95 = por %p93, %p94
      %p97 = scmp.ne.s32.totalorder %s80, %s96
      %p98 = scmp.eq.s32.totalorder %s32, 0
      %p99 = por %p97, %p98
      %s100 = ssub.s32 %s33, %s45
      %p101 = scmp.eq.s32.totalorder %s100, 0
      %s103 = sadd.s32 %s102, 1
      %s104 = scalar_select %p101, %s102, %s103
      %p107 = pneg %p101
      %p108 = scmp.eq.s32.totalorder %s26, 1
      %p109 = por %p107, %p108
      %p110 = scmp.ne.s32.totalorder %s102, %s105
      %p111 = scmp.eq.s32.totalorder %s26, 0
      %p112 = por %p110, %p111
      %p113 = scmp.ne.s32.totalorder %s102, %s105
      %p114 = scmp.eq.s32.totalorder %s31, 1
      %p115 = por %p113, %p114
      %p116 = scmp.ne.s32.totalorder %s105, %s106
      %p117 = scmp.eq.s32.totalorder %s31, 0
      %p118 = por %p116, %p117
      %p119 = scmp.ne.s32.totalorder %s105, %s106
      %p120 = scmp.eq.s32.totalorder %s32, 1
      %p121 = por %p119, %p120
      %p123 = scmp.ne.s32.totalorder %s106, %s122
      %p124 = scmp.eq.s32.totalorder %s32, 0
      %p125 = por %p123, %p124
      %s127 = sadd.s32 %s126, 1
      %p130 = scmp.eq.s32.totalorder %s26, 1
      %p131 = scmp.ne.s32.totalorder %s126, %s128
      %p132 = scmp.eq.s32.totalorder %s26, 0
      %p133 = por %p131, %p132
      %p134 = scmp.ne.s32.totalorder %s126, %s128
      %p135 = scmp.eq.s32.totalorder %s31, 1
      %p136 = por %p134, %p135
      %p137 = scmp.ne.s32.totalorder %s128, %s129
      %p138 = scmp.eq.s32.totalorder %s31, 0
      %p139 = por %p137, %p138
      %p140 = scmp.ne.s32.totalorder %s128, %s129
      %p141 = scmp.eq.s32.totalorder %s32, 1
      %p142 = por %p140, %p141
      %p144 = scmp.ne.s32.totalorder %s129, %s143
      %p145 = scmp.eq.s32.totalorder %s32, 0
      %p146 = por %p144, %p145
      %s148 = sadd.s32 %s147, 1
      %p151 = scmp.eq.s32.totalorder %s26, 1
      %p152 = scmp.ne.s32.totalorder %s147, %s149
      %p153 = scmp.eq.s32.totalorder %s26, 0
      %p154 = por %p152, %p153
      %p155 = scmp.ne.s32.totalorder %s147, %s149
      %p156 = scmp.eq.s32.totalorder %s31, 1
      %p157 = por %p155, %p156
      %p158 = scmp.ne.s32.totalorder %s149, %s150
      %p159 = scmp.eq.s32.totalorder %s31, 0
      %p160 = por %p158, %p159
      %p161 = scmp.ne.s32.totalorder %s149, %s150
      %p162 = scmp.eq.s32.totalorder %s32, 1
      %p163 = por %p161, %p162
      %p165 = scmp.ne.s32.totalorder %s150, %s164
      %p166 = scmp.eq.s32.totalorder %s32, 0
      %p167 = por %p165, %p166
      %s169 = sadd.s32 %s168, 1
      %p172 = scmp.eq.s32.totalorder %s26, 1
      %p173 = scmp.ne.s32.totalorder %s168, %s170
      %p174 = scmp.eq.s32.totalorder %s26, 0
      %p175 = por %p173, %p174
      %p176 = scmp.ne.s32.totalorder %s168, %s170
      %p177 = scmp.eq.s32.totalorder %s31, 1
      %p178 = por %p176, %p177
      %p179 = scmp.ne.s32.totalorder %s170, %s171
      %p180 = scmp.eq.s32.totalorder %s31, 0
      %p181 = por %p179, %p180
      %p182 = scmp.ne.s32.totalorder %s170, %s171
      %p183 = scmp.eq.s32.totalorder %s32, 1
      %p184 = por %p182, %p183
      %p186 = scmp.ne.s32.totalorder %s171, %s185
      %p187 = scmp.eq.s32.totalorder %s32, 0
      %p188 = por %p186, %p187
      %s190 = sadd.s32 %s189, 1
      %p193 = scmp.eq.s32.totalorder %s26, 1
      %p194 = scmp.ne.s32.totalorder %s189, %s191
      %p195 = scmp.eq.s32.totalorder %s26, 0
      %p196 = por %p194, %p195
      %p197 = scmp.ne.s32.totalorder %s189, %s191
      %p198 = scmp.eq.s32.totalorder %s31, 1
      %p199 = por %p197, %p198
      %p200 = scmp.ne.s32.totalorder %s191, %s192
      %p201 = scmp.eq.s32.totalorder %s31, 0
      %p202 = por %p200, %p201
      %p203 = scmp.ne.s32.totalorder %s191, %s192
      %p204 = scmp.eq.s32.totalorder %s32, 1
      %p205 = por %p203, %p204
      %p207 = scmp.ne.s32.totalorder %s192, %s206
      %p208 = scmp.eq.s32.totalorder %s32, 0
      %p209 = por %p207, %p208
      %s211 = sadd.s32 %s210, 1
      %p214 = scmp.eq.s32.totalorder %s26, 1
      %p215 = scmp.ne.s32.totalorder %s210, %s212
      %p216 = scmp.eq.s32.totalorder %s26, 0
      %p217 = por %p215, %p216
      %p218 = scmp.ne.s32.totalorder %s210, %s212
      %p219 = scmp.eq.s32.totalorder %s31, 1
      %p220 = por %p218, %p219
      %p221 = scmp.ne.s32.totalorder %s212, %s213
      %p222 = scmp.eq.s32.totalorder %s31, 0
      %p223 = por %p221, %p222
      %p224 = scmp.ne.s32.totalorder %s212, %s213
      %p225 = scmp.eq.s32.totalorder %s32, 1
      %p226 = por %p224, %p225
      %p228 = scmp.ne.s32.totalorder %s213, %s227
      %p229 = scmp.eq.s32.totalorder %s32, 0
      %p230 = por %p228, %p229
      %s232 = sadd.s32 %s231, 1
      %p235 = scmp.eq.s32.totalorder %s26, 1
      %p236 = scmp.ne.s32.totalorder %s231, %s233
      %p237 = scmp.eq.s32.totalorder %s26, 0
      %p238 = por %p236, %p237
      %p239 = scmp.ne.s32.totalorder %s231, %s233
      %p240 = scmp.eq.s32.totalorder %s31, 1
      %p241 = por %p239, %p240
      %p242 = scmp.ne.s32.totalorder %s233, %s234
      %p243 = scmp.eq.s32.totalorder %s31, 0
      %p244 = por %p242, %p243
      %p245 = scmp.ne.s32.totalorder %s233, %s234
      %p246 = scmp.eq.s32.totalorder %s32, 1
      %p247 = por %p245, %p246
      %p249 = scmp.ne.s32.totalorder %s234, %s248
      %p250 = scmp.eq.s32.totalorder %s32, 0
      %p251 = por %p249, %p250
      %s252 = ssub.s32 %s33, %s45
      %s253 = ssub.s32 %s34, %s41
      %s254 = sor.u32 %s252, %s253
      %p255 = scmp.eq.s32.totalorder %s254, 0
      %s257 = sadd.s32 %s256, 1
      %s258 = scalar_select %p255, %s256, %s257
      %p261 = pneg %p255
      %p262 = scmp.eq.s32.totalorder %s26, 1
      %p263 = por %p261, %p262
      %p264 = scmp.ne.s32.totalorder %s256, %s259
      %p265 = scmp.eq.s32.totalorder %s26, 0
      %p266 = por %p264, %p265
      %p267 = scmp.ne.s32.totalorder %s256, %s259
      %p268 = scmp.eq.s32.totalorder %s31, 1
      %p269 = por %p267, %p268
      %p270 = scmp.ne.s32.totalorder %s259, %s260
      %p271 = scmp.eq.s32.totalorder %s31, 0
      %p272 = por %p270, %p271
      %p273 = scmp.ne.s32.totalorder %s259, %s260
      %p274 = scmp.eq.s32.totalorder %s32, 1
      %p275 = por %p273, %p274
      %p277 = scmp.ne.s32.totalorder %s260, %s276
      %p278 = scmp.eq.s32.totalorder %s32, 0
      %p279 = por %p277, %p278
      %p280 = scmp.le.s32.totalorder 1, %s26
      %p281 = scmp.lt.s32.totalorder %s26, 3
      %p282 = pnand %p280, %p281
      %p283 = pneg %p282
      // Predicated region
      $region9: #{tpu_custom_call.1} parent=5 // pred_check
        _
      $region10: #{tpu_custom_call.1} parent=5 // pred_check_branch
        %285 = sbr.rel (%p282) target = $region12
      $region11: #{tpu_custom_call.1} parent=5 // pred_region
        %s286 = ssub.s32 %s26, 1
        // Predicated region
        $region13: #{tpu_custom_call.1} parent=11 // pred_check
          %p287 = pneg %p139
        $region14: #{tpu_custom_call.1} parent=11 // pred_check_branch
          %289 = sbr.rel (%p287) target = $region16
        $region15: #{tpu_custom_call.1} parent=11 // pred_region
          %s291 = ssub.s32 512, 512
          %292 = vsyncadd [#allocation11], %s291
          %s293 = sshll.u32 [#allocation10], 4
          %s294 = int_to_ptr.vmem [resolvable:$true] %s293
          %299 = dma.hbm_to_vmem [thread:$0]  %s3, 512, %s294, [#allocation11], 128, 128, 8
        $region16: #{tpu_custom_call.1} parent=11 // pred_fallthru
          _
        // Predicated region
        $region17: #{tpu_custom_call.1} parent=11 // pred_check
          %p300 = pneg %p160
        $region18: #{tpu_custom_call.1} parent=11 // pred_check_branch
          %302 = sbr.rel (%p300) target = $region20
        $region19: #{tpu_custom_call.1} parent=11 // pred_region
          %s304 = ssub.s32 512, 512
          %305 = vsyncadd [#allocation11], %s304
          %s306 = sshll.u32 [#allocation12], 4
          %s307 = int_to_ptr.vmem [resolvable:$true] %s306
          %312 = dma.hbm_to_vmem [thread:$0]  %s4, 512, %s307, [#allocation11], 128, 128, 8
        $region20: #{tpu_custom_call.1} parent=11 // pred_fallthru
          _
        // Predicated region
        $region21: #{tpu_custom_call.1} parent=11 // pred_check
          %p313 = pneg %p181
        $region22: #{tpu_custom_call.1} parent=11 // pred_check_branch
          %315 = sbr.rel (%p313) target = $region24
        $region23: #{tpu_custom_call.1} parent=11 // pred_region
          %s317 = ssub.s32 512, 512
          %318 = vsyncadd [#allocation14], %s317
          %s319 = sshll.u32 [#allocation13], 4
          %s320 = int_to_ptr.vmem [resolvable:$true] %s319
          %325 = dma.hbm_to_vmem [thread:$0]  %s5, 512, %s320, [#allocation14], 128, 128, 8
        $region24: #{tpu_custom_call.1} parent=11 // pred_fallthru
          _
        // Predicated region
        $region25: #{tpu_custom_call.1} parent=11 // pred_check
          %p326 = pneg %p202
        $region26: #{tpu_custom_call.1} parent=11 // pred_check_branch
          %328 = sbr.rel (%p326) target = $region28
        $region27: #{tpu_custom_call.1} parent=11 // pred_region
          _
        $region28: #{tpu_custom_call.1} parent=11 // pred_fallthru
          _
        // Predicated region
        $region29: #{tpu_custom_call.1} parent=11 // pred_check
          %p329 = pneg %p223
        $region30: #{tpu_custom_call.1} parent=11 // pred_check_branch
          %331 = sbr.rel (%p329) target = $region32
        $region31: #{tpu_custom_call.1} parent=11 // pred_region
          _
        $region32: #{tpu_custom_call.1} parent=11 // pred_fallthru
          _
        // Predicated region
        $region33: #{tpu_custom_call.1} parent=11 // pred_check
          %p332 = pneg %p244
        $region34: #{tpu_custom_call.1} parent=11 // pred_check_branch
          %334 = sbr.rel (%p332) target = $region36
        $region35: #{tpu_custom_call.1} parent=11 // pred_region
          _
        $region36: #{tpu_custom_call.1} parent=11 // pred_fallthru
          _
      $region12: #{tpu_custom_call.1} parent=5 // pred_fallthru
        _
      %p335 = scmp.lt.s32.totalorder %s26, 2
      // Predicated region
      $region37: #{tpu_custom_call.1} parent=5 // pred_check
        %p336 = pneg %p335
      $region38: #{tpu_custom_call.1} parent=5 // pred_check_branch
        %338 = sbr.rel (%p336) target = $region40
      $region39: #{tpu_custom_call.1} parent=5 // pred_region
        // Predicated region
        $region41: #{tpu_custom_call.1} parent=39 // pred_check
          %p339 = pneg %p60
        $region42: #{tpu_custom_call.1} parent=39 // pred_check_branch
          %341 = sbr.rel (%p339) target = $region44
        $region43: #{tpu_custom_call.1} parent=39 // pred_region
          %s342 = sand.u32 %s50, 1
          %s343 = scalar_lea.sflag [#allocation5], %s342
          %s344 = sand.u32 %s50, 1
          %s345 = smul.addr %s344, 8
          %s346 = scalar_lea.vmem [#allocation4], %s345
          %s348 = ssub.s32 128, 128
          %349 = vsyncadd %s343, %s348
          %s350 = sadd.s32 %s34, %s33
          %s351 = smul.addr %s350, 128
          %s352 = scalar_lea.hbm %s0, %s351
          %s354 = sshll.u32 %s346, 4
          %s355 = int_to_ptr.vmem [resolvable:$true] %s354
          %357 = dma.hbm_to_vmem [thread:$0]  %s352, 128, %s355, %s343
        $region44: #{tpu_custom_call.1} parent=39 // pred_fallthru
          _
        // Predicated region
        $region45: #{tpu_custom_call.1} parent=39 // pred_check
          %p358 = pneg %p86
        $region46: #{tpu_custom_call.1} parent=39 // pred_check_branch
          %360 = sbr.rel (%p358) target = $region48
        $region47: #{tpu_custom_call.1} parent=39 // pred_region
          %s361 = sand.u32 %s26, 1
          %s362 = scalar_lea.sflag [#allocation8], %s361
          %s363 = sand.u32 %s76, 1
          %s364 = smul.addr %s363, 8
          %s365 = scalar_lea.vmem [#allocation7], %s364
          %s367 = ssub.s32 128, 128
          %368 = vsyncadd %s362, %s367
          %s369 = smul.addr %s33, 128
          %s370 = scalar_lea.hbm %s1, %s369
          %s372 = sshll.u32 %s365, 4
          %s373 = int_to_ptr.vmem [resolvable:$true] %s372
          %375 = dma.hbm_to_vmem [thread:$0]  %s370, 128, %s373, %s362
        $region48: #{tpu_custom_call.1} parent=39 // pred_fallthru
          _
        // Predicated region
        $region49: #{tpu_custom_call.1} parent=39 // pred_check
          %p376 = pneg %p112
        $region50: #{tpu_custom_call.1} parent=39 // pred_check_branch
          %378 = sbr.rel (%p376) target = $region52
        $region51: #{tpu_custom_call.1} parent=39 // pred_region
          %s379 = sand.u32 %s26, 1
          %s380 = scalar_lea.sflag [#allocation8], %s379
          %s381 = sand.u32 %s102, 1
          %s382 = smul.addr %s381, 8
          %s383 = scalar_lea.vmem [#allocation9], %s382
          %s385 = ssub.s32 128, 128
          %386 = vsyncadd %s380, %s385
          %s387 = smul.addr %s33, 128
          %s388 = scalar_lea.hbm %s2, %s387
          %s390 = sshll.u32 %s383, 4
          %s391 = int_to_ptr.vmem [resolvable:$true] %s390
          %393 = dma.hbm_to_vmem [thread:$0]  %s388, 128, %s391, %s380
        $region52: #{tpu_custom_call.1} parent=39 // pred_fallthru
          _
      $region40: #{tpu_custom_call.1} parent=5 // pred_fallthru
        _
      %p394 = scmp.le.s32.totalorder 1, %s26
      %p395 = scmp.lt.s32.totalorder %s26, 3
      %p396 = pnand %p394, %p395
      %p397 = pneg %p396
      // Predicated region
      $region53: #{tpu_custom_call.1} parent=5 // pred_check
        _
      $region54: #{tpu_custom_call.1} parent=5 // pred_check_branch
        %399 = sbr.rel (%p396) target = $region56
      $region55: #{tpu_custom_call.1} parent=5 // pred_region
        %s400 = ssub.s32 %s26, 1
        %s401 = sand.u32 %s53, 1
        %s402 = scalar_lea.sflag [#allocation5], %s401
        %s403 = sand.u32 %s53, 1
        %s404 = smul.addr %s403, 8
        %s405 = scalar_lea.vmem [#allocation4], %s404
        // Predicated region
        $region57: #{tpu_custom_call.1} parent=55 // pred_check
          %p406 = pneg %p66
        $region58: #{tpu_custom_call.1} parent=55 // pred_check_branch
          %408 = sbr.rel (%p406) target = $region60
        $region59: #{tpu_custom_call.1} parent=55 // pred_region
          %409 = dma.done %s402, 128
        $region60: #{tpu_custom_call.1} parent=55 // pred_fallthru
          _
        %s410 = sand.u32 %s31, 1
        %s411 = scalar_lea.sflag [#allocation8], %s410
        %s412 = sand.u32 %s79, 1
        %s413 = smul.addr %s412, 8
        %s414 = scalar_lea.vmem [#allocation7], %s413
        // Predicated region
        $region61: #{tpu_custom_call.1} parent=55 // pred_check
          %p415 = pneg %p92
        $region62: #{tpu_custom_call.1} parent=55 // pred_check_branch
          %417 = sbr.rel (%p415) target = $region64
        $region63: #{tpu_custom_call.1} parent=55 // pred_region
          %418 = dma.done %s411, 128
        $region64: #{tpu_custom_call.1} parent=55 // pred_fallthru
          _
        %s419 = sand.u32 %s31, 1
        %s420 = scalar_lea.sflag [#allocation8], %s419
        %s421 = sand.u32 %s105, 1
        %s422 = smul.addr %s421, 8
        %s423 = scalar_lea.vmem [#allocation9], %s422
        // Predicated region
        $region65: #{tpu_custom_call.1} parent=55 // pred_check
          %p424 = pneg %p118
        $region66: #{tpu_custom_call.1} parent=55 // pred_check_branch
          %426 = sbr.rel (%p424) target = $region68
        $region67: #{tpu_custom_call.1} parent=55 // pred_region
          %427 = dma.done %s420, 128
        $region68: #{tpu_custom_call.1} parent=55 // pred_fallthru
          _
        // Predicated region
        $region69: #{tpu_custom_call.1} parent=55 // pred_check
          %p428 = pneg %p139
        $region70: #{tpu_custom_call.1} parent=55 // pred_check_branch
          %430 = sbr.rel (%p428) target = $region72
        $region71: #{tpu_custom_call.1} parent=55 // pred_region
          %431 = dma.done [#allocation11], 512
        $region72: #{tpu_custom_call.1} parent=55 // pred_fallthru
          _
        // Predicated region
        $region73: #{tpu_custom_call.1} parent=55 // pred_check
          %p432 = pneg %p160
        $region74: #{tpu_custom_call.1} parent=55 // pred_check_branch
          %434 = sbr.rel (%p432) target = $region76
        $region75: #{tpu_custom_call.1} parent=55 // pred_region
          %435 = dma.done [#allocation11], 512
        $region76: #{tpu_custom_call.1} parent=55 // pred_fallthru
          _
        // Predicated region
        $region77: #{tpu_custom_call.1} parent=55 // pred_check
          %p436 = pneg %p181
        $region78: #{tpu_custom_call.1} parent=55 // pred_check_branch
          %438 = sbr.rel (%p436) target = $region80
        $region79: #{tpu_custom_call.1} parent=55 // pred_region
          %439 = dma.done [#allocation14], 512
        $region80: #{tpu_custom_call.1} parent=55 // pred_fallthru
          _
        %s440 = sand.u32 %s53, 1
        %s441 = scalar_lea.sflag [#allocation5], %s440
        %s442 = sand.u32 %s53, 1
        %s443 = smul.addr %s442, 8
        %s444 = scalar_lea.vmem [#allocation4], %s443
        %p445 = pneg %p66
        %p446 = pneg %p63
        %s447 = sand.u32 %s31, 1
        %s448 = scalar_lea.sflag [#allocation8], %s447
        %s449 = sand.u32 %s79, 1
        %s450 = smul.addr %s449, 8
        %s451 = scalar_lea.vmem [#allocation7], %s450
        %p452 = pneg %p92
        %p453 = pneg %p89
        %s454 = sand.u32 %s31, 1
        %s455 = scalar_lea.sflag [#allocation8], %s454
        %s456 = sand.u32 %s105, 1
        %s457 = smul.addr %s456, 8
        %s458 = scalar_lea.vmem [#allocation9], %s457
        %p459 = pneg %p118
        %p460 = pneg %p115
        %p461 = pneg %p139
        %p462 = pneg %p136
        %p463 = pneg %p160
        %p464 = pneg %p157
        %p465 = pneg %p181
        %p466 = pneg %p178
        %p467 = pneg %p202
        %p468 = pneg %p199
        %p469 = pneg %p223
        %p470 = pneg %p220
        %p471 = pneg %p244
        %p472 = pneg %p241
        %p473 = pneg %p272
        %p474 = pneg %p269
        %s475 = sand.u32 %s259, 1
        %s476 = scalar_lea.sflag [#allocation6], %s475
        %s477 = sand.u32 %s259, 1
        %s478 = smul.addr %s477, 8
        %s479 = scalar_lea.vmem [#allocation15], %s478
        %p480 = scmp.eq.s32.totalorder %s36, 0
        // Predicated region
        $region81: #{tpu_custom_call.1} parent=55 // pred_check
          %p481 = pneg %p480
        $region82: #{tpu_custom_call.1} parent=55 // pred_check_branch
          %483 = sbr.rel (%p481) target = $region84
        $region83: #{tpu_custom_call.1} parent=55 // pred_region
          %v484 = vld [vmem:[%s414] sm:$0xff]
          %v485 = vld [vmem:[%s423] sm:$0xff]
          %v486 = vld [vmem:[#allocation12] sm:$0xff]
          %v487 = vld [vmem:[#allocation12 + $0x8] sm:$0xff]
          %v488 = vld [vmem:[#allocation12 + $0x10] sm:$0xff]
          %v489 = vld [vmem:[#allocation12 + $0x18] sm:$0xff]
          %v490 = vld [vmem:[%s7] sm:$0x1]
          %v492 = vlaneseq
          %v493 = vshrl.u32 %v492, 7
          %v494 = vsub.s32 0, %v493
          %v495 = vrot.slane %v490, %v494
          %vm497 = vcmask 261120
          %v499 = vsel %vm497, %v484, 0
          %501 = vmatprep.subr.mxu0 0.0
          %502 = vmatpush1.msra.mxu0 0.0
          %503 = vmatprep.subr.mxu0 0.0
          %504 = vmatpush1.msra.mxu0 0.0
          %505 = vmatprep.subr.mxu0 0.0
          %506 = vmatpush1.msra.mxu0 0.0
          %507 = vmatprep.subr.mxu0 0.0
          %508 = vmatpush1.msra.mxu0 0.0
          %509 = vmatprep.subr.mxu0 0.0
          %510 = vmatpush1.msra.mxu0 0.0
          %511 = vmatprep.subr.mxu0 0.0
          %512 = vmatpush1.msra.mxu0 0.0
          %513 = vmatprep.subr.mxu0 0.0
          %514 = vmatpush1.msra.mxu0 0.0
          %515 = vmatprep.subr.mxu0 0.0
          %516 = vmatpush1.msra.mxu0 0.0
          %517 = vmatprep.subr.mxu0 0.0
          %518 = vmatpush1.msra.mxu0 0.0
          %519 = vmatprep.subr.mxu0 0.0
          %520 = vmatpush1.msra.mxu0 0.0
          %521 = vmatprep.subr.mxu0 0.0
          %522 = vmatpush1.msra.mxu0 0.0
          %523 = vmatprep.subr.mxu0 0.0
          %524 = vmatpush1.msra.mxu0 0.0
          %525 = vmatprep.subr.mxu0 0.0
          %526 = vmatpush1.msra.mxu0 %v489
          %527 = vmatprep.subr.mxu0 0.0
          %528 = vmatpush1.msra.mxu0 %v488
          %529 = vmatprep.subr.mxu0 0.0
          %530 = vmatpush1.msra.mxu0 %v487
          %531 = vmatprep.subr.mxu0 0.0
          %532 = vmatpush1.msra.mxu0 %v486
          %533 = vmatprep.subr.mxu0 0.0
          %534 = vmatpush2.msra.mxu0 0.0
          %535 = vmatprep.subr.mxu0 0.0
          %536 = vmatpush2.msra.mxu0 0.0
          %537 = vmatprep.subr.mxu0 0.0
          %538 = vmatpush2.msra.mxu0 0.0
          %539 = vmatprep.subr.mxu0 0.0
          %540 = vmatpush2.msra.mxu0 0.0
          %541 = vmatprep.subr.mxu0 0.0
          %542 = vmatpush2.msra.mxu0 0.0
          %543 = vmatprep.subr.mxu0 0.0
          %544 = vmatpush2.msra.mxu0 0.0
          %545 = vmatprep.subr.mxu0 0.0
          %546 = vmatpush2.msra.mxu0 0.0
          %547 = vmatprep.subr.mxu0 0.0
          %548 = vmatpush2.msra.mxu0 0.0
          %549 = vmatprep.subr.mxu0 0.0
          %550 = vmatpush2.msra.mxu0 0.0
          %551 = vmatprep.subr.mxu0 0.0
          %552 = vmatpush2.msra.mxu0 0.0
          %553 = vmatprep.subr.mxu0 0.0
          %554 = vmatpush2.msra.mxu0 0.0
          %555 = vmatprep.subr.mxu0 0.0
          %556 = vmatpush2.msra.mxu0 0.0
          %557 = vmatprep.subr.mxu0 0.0
          %558 = vmatpush2.msra.mxu0 0.0
          %559 = vmatprep.subr.mxu0 0.0
          %560 = vmatpush2.msra.mxu0 0.0
          %561 = vmatprep.subr.mxu0 0.0
          %562 = vmatpush2.msra.mxu0 0.0
          %563 = vmatprep.subr.mxu0 0.0
          %564 = vmatpush2.msra.mxu0 0.0
          %565 = vmatprep.mubr.f32.mxu0 0.0
          %566 = vmatmul.mubr.f32.gmra.mxu0 %v499
          %v567 = vpop.f32.mrf.mxu0
          %v568 = vadd.f32 %v495, %v567
          %v569 = vpop.f32.mrf.mxu0
          %570 = vdwg.mxu0
          %v571 = vld [vmem:[#allocation13] sm:$0xff]
          %v572 = vld [vmem:[#allocation13 + $0x8] sm:$0xff]
          %v573 = vld [vmem:[#allocation13 + $0x10] sm:$0xff]
          %v574 = vld [vmem:[#allocation13 + $0x18] sm:$0xff]
          %v575 = vld [vmem:[%s8] sm:$0x1]
          %v577 = vlaneseq
          %v578 = vshrl.u32 %v577, 7
          %v579 = vsub.s32 0, %v578
          %v580 = vrot.slane %v575, %v579
          %v583 = vsel %vm497, %v485, 0
          %585 = vmatprep.subr.mxu0 0.0
          %586 = vmatpush1.msra.mxu0 0.0
          %587 = vmatprep.subr.mxu0 0.0
          %588 = vmatpush1.msra.mxu0 0.0
          %589 = vmatprep.subr.mxu0 0.0
          %590 = vmatpush1.msra.mxu0 0.0
          %591 = vmatprep.subr.mxu0 0.0
          %592 = vmatpush1.msra.mxu0 0.0
          %593 = vmatprep.subr.mxu0 0.0
          %594 = vmatpush1.msra.mxu0 0.0
          %595 = vmatprep.subr.mxu0 0.0
          %596 = vmatpush1.msra.mxu0 0.0
          %597 = vmatprep.subr.mxu0 0.0
          %598 = vmatpush1.msra.mxu0 0.0
          %599 = vmatprep.subr.mxu0 0.0
          %600 = vmatpush1.msra.mxu0 0.0
          %601 = vmatprep.subr.mxu0 0.0
          %602 = vmatpush1.msra.mxu0 0.0
          %603 = vmatprep.subr.mxu0 0.0
          %604 = vmatpush1.msra.mxu0 0.0
          %605 = vmatprep.subr.mxu0 0.0
          %606 = vmatpush1.msra.mxu0 0.0
          %607 = vmatprep.subr.mxu0 0.0
          %608 = vmatpush1.msra.mxu0 0.0
          %609 = vmatprep.subr.mxu0 0.0
          %610 = vmatpush1.msra.mxu0 %v574
          %611 = vmatprep.subr.mxu0 0.0
          %612 = vmatpush1.msra.mxu0 %v573
          %613 = vmatprep.subr.mxu0 0.0
          %614 = vmatpush1.msra.mxu0 %v572
          %615 = vmatprep.subr.mxu0 0.0
          %616 = vmatpush1.msra.mxu0 %v571
          %617 = vmatprep.subr.mxu0 0.0
          %618 = vmatpush2.msra.mxu0 0.0
          %619 = vmatprep.subr.mxu0 0.0
          %620 = vmatpush2.msra.mxu0 0.0
          %621 = vmatprep.subr.mxu0 0.0
          %622 = vmatpush2.msra.mxu0 0.0
          %623 = vmatprep.subr.mxu0 0.0
          %624 = vmatpush2.msra.mxu0 0.0
          %625 = vmatprep.subr.mxu0 0.0
          %626 = vmatpush2.msra.mxu0 0.0
          %627 = vmatprep.subr.mxu0 0.0
          %628 = vmatpush2.msra.mxu0 0.0
          %629 = vmatprep.subr.mxu0 0.0
          %630 = vmatpush2.msra.mxu0 0.0
          %631 = vmatprep.subr.mxu0 0.0
          %632 = vmatpush2.msra.mxu0 0.0
          %633 = vmatprep.subr.mxu0 0.0
          %634 = vmatpush2.msra.mxu0 0.0
          %635 = vmatprep.subr.mxu0 0.0
          %636 = vmatpush2.msra.mxu0 0.0
          %637 = vmatprep.subr.mxu0 0.0
          %638 = vmatpush2.msra.mxu0 0.0
          %639 = vmatprep.subr.mxu0 0.0
          %640 = vmatpush2.msra.mxu0 0.0
          %641 = vmatprep.subr.mxu0 0.0
          %642 = vmatpush2.msra.mxu0 0.0
          %643 = vmatprep.subr.mxu0 0.0
          %644 = vmatpush2.msra.mxu0 0.0
          %645 = vmatprep.subr.mxu0 0.0
          %646 = vmatpush2.msra.mxu0 0.0
          %647 = vmatprep.subr.mxu0 0.0
          %648 = vmatpush2.msra.mxu0 0.0
          %649 = vmatprep.mubr.f32.mxu0 0.0
          %650 = vmatmul.mubr.f32.gmra.mxu0 %v583
          %v651 = vpop.f32.mrf.mxu0
          %v652 = vadd.f32 %v580, %v651
          %v653 = vpop.f32.mrf.mxu0
          %654 = vdwg.mxu0
          %655 = vst.msk [vmem:[#allocation2] sm:$0xff] %vm497, %v568
          %656 = vst.msk [vmem:[#allocation3] sm:$0xff] %vm497, %v652
        $region84: #{tpu_custom_call.1} parent=55 // pred_fallthru
          _
        %v657 = vld [vmem:[%s405] sm:$0xff]
        %v658 = vld [vmem:[#allocation10] sm:$0xff]
        %v659 = vld [vmem:[#allocation10 + $0x8] sm:$0xff]
        %v660 = vld [vmem:[#allocation10 + $0x10] sm:$0xff]
        %v661 = vld [vmem:[#allocation10 + $0x18] sm:$0xff]
        %v662 = vld [vmem:[%s6] sm:$0x1]
        %v664 = vlaneseq
        %v665 = vshrl.u32 %v664, 7
        %v666 = vsub.s32 0, %v665
        %v667 = vrot.slane %v662, %v666
        %vm669 = vcmask 261120
        %v671 = vsel %vm669, %v657, 0
        %673 = vmatprep.subr.mxu0 0.0
        %674 = vmatpush1.msra.mxu0 0.0
        %675 = vmatprep.subr.mxu0 0.0
        %676 = vmatpush1.msra.mxu0 0.0
        %677 = vmatprep.subr.mxu0 0.0
        %678 = vmatpush1.msra.mxu0 0.0
        %679 = vmatprep.subr.mxu0 0.0
        %680 = vmatpush1.msra.mxu0 0.0
        %681 = vmatprep.subr.mxu0 0.0
        %682 = vmatpush1.msra.mxu0 0.0
        %683 = vmatprep.subr.mxu0 0.0
        %684 = vmatpush1.msra.mxu0 0.0
        %685 = vmatprep.subr.mxu0 0.0
        %686 = vmatpush1.msra.mxu0 0.0
        %687 = vmatprep.subr.mxu0 0.0
        %688 = vmatpush1.msra.mxu0 0.0
        %689 = vmatprep.subr.mxu0 0.0
        %690 = vmatpush1.msra.mxu0 0.0
        %691 = vmatprep.subr.mxu0 0.0
        %692 = vmatpush1.msra.mxu0 0.0
        %693 = vmatprep.subr.mxu0 0.0
        %694 = vmatpush1.msra.mxu0 0.0
        %695 = vmatprep.subr.mxu0 0.0
        %696 = vmatpush1.msra.mxu0 0.0
        %697 = vmatprep.subr.mxu0 0.0
        %698 = vmatpush1.msra.mxu0 %v661
        %699 = vmatprep.subr.mxu0 0.0
        %700 = vmatpush1.msra.mxu0 %v660
        %701 = vmatprep.subr.mxu0 0.0
        %702 = vmatpush1.msra.mxu0 %v659
        %703 = vmatprep.subr.mxu0 0.0
        %704 = vmatpush1.msra.mxu0 %v658
        %705 = vmatprep.subr.mxu0 0.0
        %706 = vmatpush2.msra.mxu0 0.0
        %707 = vmatprep.subr.mxu0 0.0
        %708 = vmatpush2.msra.mxu0 0.0
        %709 = vmatprep.subr.mxu0 0.0
        %710 = vmatpush2.msra.mxu0 0.0
        %711 = vmatprep.subr.mxu0 0.0
        %712 = vmatpush2.msra.mxu0 0.0
        %713 = vmatprep.subr.mxu0 0.0
        %714 = vmatpush2.msra.mxu0 0.0
        %715 = vmatprep.subr.mxu0 0.0
        %716 = vmatpush2.msra.mxu0 0.0
        %717 = vmatprep.subr.mxu0 0.0
        %718 = vmatpush2.msra.mxu0 0.0
        %719 = vmatprep.subr.mxu0 0.0
        %720 = vmatpush2.msra.mxu0 0.0
        %721 = vmatprep.subr.mxu0 0.0
        %722 = vmatpush2.msra.mxu0 0.0
        %723 = vmatprep.subr.mxu0 0.0
        %724 = vmatpush2.msra.mxu0 0.0
        %725 = vmatprep.subr.mxu0 0.0
        %726 = vmatpush2.msra.mxu0 0.0
        %727 = vmatprep.subr.mxu0 0.0
        %728 = vmatpush2.msra.mxu0 0.0
        %729 = vmatprep.subr.mxu0 0.0
        %730 = vmatpush2.msra.mxu0 0.0
        %731 = vmatprep.subr.mxu0 0.0
        %732 = vmatpush2.msra.mxu0 0.0
        %733 = vmatprep.subr.mxu0 0.0
        %734 = vmatpush2.msra.mxu0 0.0
        %735 = vmatprep.subr.mxu0 0.0
        %736 = vmatpush2.msra.mxu0 0.0
        %737 = vmatprep.mubr.f32.mxu0 0.0
        %738 = vmatmul.mubr.f32.gmra.mxu0 %v671
        %v739 = vpop.f32.mrf.mxu0
        %v740 = vadd.f32 %v667, %v739
        %v741 = vpop.f32.mrf.mxu0
        %742 = vdwg.mxu0
        %v743 = vmul.f32 %v740, 0.17677669
        %v744 = vld [vmem:[#allocation2] sm:$0xff]
        %v745 = vld [vmem:[#allocation3] sm:$0xff]
        %vm746 = vcmask 64512
        %v748 = vsel %vm746, %v743, 0
        %v751 = vsel %vm746, %v744, 0
        %753 = vmatprep.subr.mxu0 0.0
        %754 = vmatpush1.xpose.msra.mxu0 0.0
        %755 = vmatprep.subr.mxu0 0.0
        %756 = vmatpush1.xpose.msra.mxu0 0.0
        %757 = vmatprep.subr.mxu0 0.0
        %758 = vmatpush1.xpose.msra.mxu0 0.0
        %759 = vmatprep.subr.mxu0 0.0
        %760 = vmatpush1.xpose.msra.mxu0 0.0
        %761 = vmatprep.subr.mxu0 0.0
        %762 = vmatpush1.xpose.msra.mxu0 0.0
        %763 = vmatprep.subr.mxu0 0.0
        %764 = vmatpush1.xpose.msra.mxu0 0.0
        %765 = vmatprep.subr.mxu0 0.0
        %766 = vmatpush1.xpose.msra.mxu0 0.0
        %767 = vmatprep.subr.mxu0 0.0
        %768 = vmatpush1.xpose.msra.mxu0 0.0
        %769 = vmatprep.subr.mxu0 0.0
        %770 = vmatpush1.xpose.msra.mxu0 0.0
        %771 = vmatprep.subr.mxu0 0.0
        %772 = vmatpush1.xpose.msra.mxu0 0.0
        %773 = vmatprep.subr.mxu0 0.0
        %774 = vmatpush1.xpose.msra.mxu0 0.0
        %775 = vmatprep.subr.mxu0 0.0
        %776 = vmatpush1.xpose.msra.mxu0 0.0
        %777 = vmatprep.subr.mxu0 0.0
        %778 = vmatpush1.xpose.msra.mxu0 0.0
        %779 = vmatprep.subr.mxu0 0.0
        %780 = vmatpush1.xpose.msra.mxu0 0.0
        %781 = vmatprep.subr.mxu0 0.0
        %782 = vmatpush1.xpose.msra.mxu0 0.0
        %783 = vmatprep.subr.mxu0 0.0
        %784 = vmatpush1.xpose.msra.mxu0 %v751
        %785 = vmatprep.subr.mxu0 0.0
        %786 = vmatpush2.xpose.msra.mxu0 0.0
        %787 = vmatprep.subr.mxu0 0.0
        %788 = vmatpush2.xpose.msra.mxu0 0.0
        %789 = vmatprep.subr.mxu0 0.0
        %790 = vmatpush2.xpose.msra.mxu0 0.0
        %791 = vmatprep.subr.mxu0 0.0
        %792 = vmatpush2.xpose.msra.mxu0 0.0
        %793 = vmatprep.subr.mxu0 0.0
        %794 = vmatpush2.xpose.msra.mxu0 0.0
        %795 = vmatprep.subr.mxu0 0.0
        %796 = vmatpush2.xpose.msra.mxu0 0.0
        %797 = vmatprep.subr.mxu0 0.0
        %798 = vmatpush2.xpose.msra.mxu0 0.0
        %799 = vmatprep.subr.mxu0 0.0
        %800 = vmatpush2.xpose.msra.mxu0 0.0
        %801 = vmatprep.subr.mxu0 0.0
        %802 = vmatpush2.xpose.msra.mxu0 0.0
        %803 = vmatprep.subr.mxu0 0.0
        %804 = vmatpush2.xpose.msra.mxu0 0.0
        %805 = vmatprep.subr.mxu0 0.0
        %806 = vmatpush2.xpose.msra.mxu0 0.0
        %807 = vmatprep.subr.mxu0 0.0
        %808 = vmatpush2.xpose.msra.mxu0 0.0
        %809 = vmatprep.subr.mxu0 0.0
        %810 = vmatpush2.xpose.msra.mxu0 0.0
        %811 = vmatprep.subr.mxu0 0.0
        %812 = vmatpush2.xpose.msra.mxu0 0.0
        %813 = vmatprep.subr.mxu0 0.0
        %814 = vmatpush2.xpose.msra.mxu0 0.0
        %815 = vmatprep.subr.mxu0 0.0
        %816 = vmatpush2.xpose.msra.mxu0 0.0
        %817 = vmatprep.mubr.f32.mxu0 0.0
        %818 = vmatmul.mubr.f32.gmra.mxu0 %v748
        %v819 = vpop.f32.mrf.mxu0
        %v820 = vadd.f32 0.0, %v819
        %v821 = vpop.f32.mrf.mxu0
        %822 = vdwg.mxu0
        %v823 = vsel %vm746, %v820, -inf
        %824 = vmax.xlane.f32.xlu0 %v823
        %v825 = vpop.xlane.xlu0 %824
        %v826 = vsub.f32 %v820, %v825
        %v827 = vmul.f32 %v826, 1.442695
        %v828 = vpow.pop %v827
        %v829 = vsel %vm746, %v828, 0.0
        %830 = vadd.xlane.f32.xlu0 %v829
        %v831 = vpop.xlane.xlu0 %830
        %v833 = vsel %vm746, %v828, 0
        %835 = vmatprep.subr.mxu0 0.0
        %836 = vmatpush1.msra.mxu0 0.0
        %837 = vmatprep.subr.mxu0 0.0
        %838 = vmatpush1.msra.mxu0 0.0
        %839 = vmatprep.subr.mxu0 0.0
        %840 = vmatpush1.msra.mxu0 0.0
        %841 = vmatprep.subr.mxu0 0.0
        %842 = vmatpush1.msra.mxu0 0.0
        %843 = vmatprep.subr.mxu0 0.0
        %844 = vmatpush1.msra.mxu0 0.0
        %845 = vmatprep.subr.mxu0 0.0
        %846 = vmatpush1.msra.mxu0 0.0
        %847 = vmatprep.subr.mxu0 0.0
        %848 = vmatpush1.msra.mxu0 0.0
        %849 = vmatprep.subr.mxu0 0.0
        %850 = vmatpush1.msra.mxu0 0.0
        %851 = vmatprep.subr.mxu0 0.0
        %852 = vmatpush1.msra.mxu0 0.0
        %853 = vmatprep.subr.mxu0 0.0
        %854 = vmatpush1.msra.mxu0 0.0
        %855 = vmatprep.subr.mxu0 0.0
        %856 = vmatpush1.msra.mxu0 0.0
        %857 = vmatprep.subr.mxu0 0.0
        %858 = vmatpush1.msra.mxu0 0.0
        %859 = vmatprep.subr.mxu0 0.0
        %860 = vmatpush1.msra.mxu0 0.0
        %861 = vmatprep.subr.mxu0 0.0
        %862 = vmatpush1.msra.mxu0 0.0
        %863 = vmatprep.subr.mxu0 0.0
        %864 = vmatpush1.msra.mxu0 0.0
        %865 = vmatprep.subr.mxu0 0.0
        %866 = vmatpush1.msra.mxu0 %v745
        %867 = vmatprep.subr.mxu0 0.0
        %868 = vmatpush2.msra.mxu0 0.0
        %869 = vmatprep.subr.mxu0 0.0
        %870 = vmatpush2.msra.mxu0 0.0
        %871 = vmatprep.subr.mxu0 0.0
        %872 = vmatpush2.msra.mxu0 0.0
        %873 = vmatprep.subr.mxu0 0.0
        %874 = vmatpush2.msra.mxu0 0.0
        %875 = vmatprep.subr.mxu0 0.0
        %876 = vmatpush2.msra.mxu0 0.0
        %877 = vmatprep.subr.mxu0 0.0
        %878 = vmatpush2.msra.mxu0 0.0
        %879 = vmatprep.subr.mxu0 0.0
        %880 = vmatpush2.msra.mxu0 0.0
        %881 = vmatprep.subr.mxu0 0.0
        %882 = vmatpush2.msra.mxu0 0.0
        %883 = vmatprep.subr.mxu0 0.0
        %884 = vmatpush2.msra.mxu0 0.0
        %885 = vmatprep.subr.mxu0 0.0
        %886 = vmatpush2.msra.mxu0 0.0
        %887 = vmatprep.subr.mxu0 0.0
        %888 = vmatpush2.msra.mxu0 0.0
        %889 = vmatprep.subr.mxu0 0.0
        %890 = vmatpush2.msra.mxu0 0.0
        %891 = vmatprep.subr.mxu0 0.0
        %892 = vmatpush2.msra.mxu0 0.0
        %893 = vmatprep.subr.mxu0 0.0
        %894 = vmatpush2.msra.mxu0 0.0
        %895 = vmatprep.subr.mxu0 0.0
        %896 = vmatpush2.msra.mxu0 0.0
        %897 = vmatprep.subr.mxu0 0.0
        %898 = vmatpush2.msra.mxu0 0.0
        %899 = vmatprep.mubr.f32.mxu0 0.0
        %900 = vmatmul.mubr.f32.gmra.mxu0 %v833
        %v901 = vpop.f32.mrf.mxu0
        %v902 = vadd.f32 0.0, %v901
        %v903 = vpop.f32.mrf.mxu0
        %904 = vdwg.mxu0
        %v905 = vrcp.pop %v831
        %v906 = vmul.f32 %v902, %v905
        %907 = vst.msk [vmem:[%s479] sm:$0xff] %vm746, %v906
        %v908 = vld [vmem:[#allocation2] sm:$0xff]
        %v909 = vld [vmem:[#allocation3] sm:$0xff]
        %910 = vrot.lane.b32.xlu0 %v743, 120
        %v911 = vpop.permute.xlu0 %910
        %913 = vrot.lane.b32.xlu0 %v908, 120
        %v914 = vpop.permute.xlu0 %913
        %v915 = vsel %vm746, %v911, 0
        %v917 = vsel %vm746, %v914, 0
        %919 = vmatprep.subr.mxu0 0.0
        %920 = vmatpush1.xpose.msra.mxu0 0.0
        %921 = vmatprep.subr.mxu0 0.0
        %922 = vmatpush1.xpose.msra.mxu0 0.0
        %923 = vmatprep.subr.mxu0 0.0
        %924 = vmatpush1.xpose.msra.mxu0 0.0
        %925 = vmatprep.subr.mxu0 0.0
        %926 = vmatpush1.xpose.msra.mxu0 0.0
        %927 = vmatprep.subr.mxu0 0.0
        %928 = vmatpush1.xpose.msra.mxu0 0.0
        %929 = vmatprep.subr.mxu0 0.0
        %930 = vmatpush1.xpose.msra.mxu0 0.0
        %931 = vmatprep.subr.mxu0 0.0
        %932 = vmatpush1.xpose.msra.mxu0 0.0
        %933 = vmatprep.subr.mxu0 0.0
        %934 = vmatpush1.xpose.msra.mxu0 0.0
        %935 = vmatprep.subr.mxu0 0.0
        %936 = vmatpush1.xpose.msra.mxu0 0.0
        %937 = vmatprep.subr.mxu0 0.0
        %938 = vmatpush1.xpose.msra.mxu0 0.0
        %939 = vmatprep.subr.mxu0 0.0
        %940 = vmatpush1.xpose.msra.mxu0 0.0
        %941 = vmatprep.subr.mxu0 0.0
        %942 = vmatpush1.xpose.msra.mxu0 0.0
        %943 = vmatprep.subr.mxu0 0.0
        %944 = vmatpush1.xpose.msra.mxu0 0.0
        %945 = vmatprep.subr.mxu0 0.0
        %946 = vmatpush1.xpose.msra.mxu0 0.0
        %947 = vmatprep.subr.mxu0 0.0
        %948 = vmatpush1.xpose.msra.mxu0 0.0
        %949 = vmatprep.subr.mxu0 0.0
        %950 = vmatpush1.xpose.msra.mxu0 %v917
        %951 = vmatprep.subr.mxu0 0.0
        %952 = vmatpush2.xpose.msra.mxu0 0.0
        %953 = vmatprep.subr.mxu0 0.0
        %954 = vmatpush2.xpose.msra.mxu0 0.0
        %955 = vmatprep.subr.mxu0 0.0
        %956 = vmatpush2.xpose.msra.mxu0 0.0
        %957 = vmatprep.subr.mxu0 0.0
        %958 = vmatpush2.xpose.msra.mxu0 0.0
        %959 = vmatprep.subr.mxu0 0.0
        %960 = vmatpush2.xpose.msra.mxu0 0.0
        %961 = vmatprep.subr.mxu0 0.0
        %962 = vmatpush2.xpose.msra.mxu0 0.0
        %963 = vmatprep.subr.mxu0 0.0
        %964 = vmatpush2.xpose.msra.mxu0 0.0
        %965 = vmatprep.subr.mxu0 0.0
        %966 = vmatpush2.xpose.msra.mxu0 0.0
        %967 = vmatprep.subr.mxu0 0.0
        %968 = vmatpush2.xpose.msra.mxu0 0.0
        %969 = vmatprep.subr.mxu0 0.0
        %970 = vmatpush2.xpose.msra.mxu0 0.0
        %971 = vmatprep.subr.mxu0 0.0
        %972 = vmatpush2.xpose.msra.mxu0 0.0
        %973 = vmatprep.subr.mxu0 0.0
        %974 = vmatpush2.xpose.msra.mxu0 0.0
        %975 = vmatprep.subr.mxu0 0.0
        %976 = vmatpush2.xpose.msra.mxu0 0.0
        %977 = vmatprep.subr.mxu0 0.0
        %978 = vmatpush2.xpose.msra.mxu0 0.0
        %979 = vmatprep.subr.mxu0 0.0
        %980 = vmatpush2.xpose.msra.mxu0 0.0
        %981 = vmatprep.subr.mxu0 0.0
        %982 = vmatpush2.xpose.msra.mxu0 0.0
        %983 = vmatprep.mubr.f32.mxu0 0.0
        %984 = vmatmul.mubr.f32.gmra.mxu0 %v915
        %v985 = vpop.f32.mrf.mxu0
        %v986 = vadd.f32 0.0, %v985
        %v987 = vpop.f32.mrf.mxu0
        %988 = vdwg.mxu0
        %v989 = vsel %vm746, %v986, -inf
        %990 = vmax.xlane.f32.xlu0 %v989
        %v991 = vpop.xlane.xlu0 %990
        %v992 = vsub.f32 %v986, %v991
        %v993 = vmul.f32 %v992, 1.442695
        %v994 = vpow.pop %v993
        %v995 = vsel %vm746, %v994, 0.0
        %996 = vadd.xlane.f32.xlu0 %v995
        %v997 = vpop.xlane.xlu0 %996
        %999 = vrot.lane.b32.xlu0 %v909, 120
        %v1000 = vpop.permute.xlu0 %999
        %v1003 = vsel %vm746, %v994, 0
        %1005 = vmatprep.subr.mxu0 0.0
        %1006 = vmatpush1.msra.mxu0 0.0
        %1007 = vmatprep.subr.mxu0 0.0
        %1008 = vmatpush1.msra.mxu0 0.0
        %1009 = vmatprep.subr.mxu0 0.0
        %1010 = vmatpush1.msra.mxu0 0.0
        %1011 = vmatprep.subr.mxu0 0.0
        %1012 = vmatpush1.msra.mxu0 0.0
        %1013 = vmatprep.subr.mxu0 0.0
        %1014 = vmatpush1.msra.mxu0 0.0
        %1015 = vmatprep.subr.mxu0 0.0
        %1016 = vmatpush1.msra.mxu0 0.0
        %1017 = vmatprep.subr.mxu0 0.0
        %1018 = vmatpush1.msra.mxu0 0.0
        %1019 = vmatprep.subr.mxu0 0.0
        %1020 = vmatpush1.msra.mxu0 0.0
        %1021 = vmatprep.subr.mxu0 0.0
        %1022 = vmatpush1.msra.mxu0 0.0
        %1023 = vmatprep.subr.mxu0 0.0
        %1024 = vmatpush1.msra.mxu0 0.0
        %1025 = vmatprep.subr.mxu0 0.0
        %1026 = vmatpush1.msra.mxu0 0.0
        %1027 = vmatprep.subr.mxu0 0.0
        %1028 = vmatpush1.msra.mxu0 0.0
        %1029 = vmatprep.subr.mxu0 0.0
        %1030 = vmatpush1.msra.mxu0 0.0
        %1031 = vmatprep.subr.mxu0 0.0
        %1032 = vmatpush1.msra.mxu0 0.0
        %1033 = vmatprep.subr.mxu0 0.0
        %1034 = vmatpush1.msra.mxu0 0.0
        %1035 = vmatprep.subr.mxu0 0.0
        %1036 = vmatpush1.msra.mxu0 %v1000
        %1037 = vmatprep.subr.mxu0 0.0
        %1038 = vmatpush2.msra.mxu0 0.0
        %1039 = vmatprep.subr.mxu0 0.0
        %1040 = vmatpush2.msra.mxu0 0.0
        %1041 = vmatprep.subr.mxu0 0.0
        %1042 = vmatpush2.msra.mxu0 0.0
        %1043 = vmatprep.subr.mxu0 0.0
        %1044 = vmatpush2.msra.mxu0 0.0
        %1045 = vmatprep.subr.mxu0 0.0
        %1046 = vmatpush2.msra.mxu0 0.0
        %1047 = vmatprep.subr.mxu0 0.0
        %1048 = vmatpush2.msra.mxu0 0.0
        %1049 = vmatprep.subr.mxu0 0.0
        %1050 = vmatpush2.msra.mxu0 0.0
        %1051 = vmatprep.subr.mxu0 0.0
        %1052 = vmatpush2.msra.mxu0 0.0
        %1053 = vmatprep.subr.mxu0 0.0
        %1054 = vmatpush2.msra.mxu0 0.0
        %1055 = vmatprep.subr.mxu0 0.0
        %1056 = vmatpush2.msra.mxu0 0.0
        %1057 = vmatprep.subr.mxu0 0.0
        %1058 = vmatpush2.msra.mxu0 0.0
        %1059 = vmatprep.subr.mxu0 0.0
        %1060 = vmatpush2.msra.mxu0 0.0
        %1061 = vmatprep.subr.mxu0 0.0
        %1062 = vmatpush2.msra.mxu0 0.0
        %1063 = vmatprep.subr.mxu0 0.0
        %1064 = vmatpush2.msra.mxu0 0.0
        %1065 = vmatprep.subr.mxu0 0.0
        %1066 = vmatpush2.msra.mxu0 0.0
        %1067 = vmatprep.subr.mxu0 0.0
        %1068 = vmatpush2.msra.mxu0 0.0
        %1069 = vmatprep.mubr.f32.mxu0 0.0
        %1070 = vmatmul.mubr.f32.gmra.mxu0 %v1003
        %v1071 = vpop.f32.mrf.mxu0
        %v1072 = vadd.f32 0.0, %v1071
        %v1073 = vpop.f32.mrf.mxu0
        %1074 = vdwg.mxu0
        %v1075 = vrcp.pop %v997
        %v1076 = vmul.f32 %v1072, %v1075
        %1078 = vrot.lane.b32.xlu0 %v1076, 8
        %v1079 = vpop.permute.xlu0 %1078
        %vm1081 = vcmask 130112
        %1082 = vst.msk [vmem:[%s479] sm:$0xff] %vm1081, %v1079
        %v1083 = vld [vmem:[#allocation2] sm:$0xff]
        %v1084 = vld [vmem:[#allocation3] sm:$0xff]
        %1085 = vrot.lane.b32.xlu0 %v743, 112
        %v1086 = vpop.permute.xlu0 %1085
        %1088 = vrot.lane.b32.xlu0 %v1083, 112
        %v1089 = vpop.permute.xlu0 %1088
        %v1090 = vsel %vm746, %v1086, 0
        %v1092 = vsel %vm746, %v1089, 0
        %1094 = vmatprep.subr.mxu0 0.0
        %1095 = vmatpush1.xpose.msra.mxu0 0.0
        %1096 = vmatprep.subr.mxu0 0.0
        %1097 = vmatpush1.xpose.msra.mxu0 0.0
        %1098 = vmatprep.subr.mxu0 0.0
        %1099 = vmatpush1.xpose.msra.mxu0 0.0
        %1100 = vmatprep.subr.mxu0 0.0
        %1101 = vmatpush1.xpose.msra.mxu0 0.0
        %1102 = vmatprep.subr.mxu0 0.0
        %1103 = vmatpush1.xpose.msra.mxu0 0.0
        %1104 = vmatprep.subr.mxu0 0.0
        %1105 = vmatpush1.xpose.msra.mxu0 0.0
        %1106 = vmatprep.subr.mxu0 0.0
        %1107 = vmatpush1.xpose.msra.mxu0 0.0
        %1108 = vmatprep.subr.mxu0 0.0
        %1109 = vmatpush1.xpose.msra.mxu0 0.0
        %1110 = vmatprep.subr.mxu0 0.0
        %1111 = vmatpush1.xpose.msra.mxu0 0.0
        %1112 = vmatprep.subr.mxu0 0.0
        %1113 = vmatpush1.xpose.msra.mxu0 0.0
        %1114 = vmatprep.subr.mxu0 0.0
        %1115 = vmatpush1.xpose.msra.mxu0 0.0
        %1116 = vmatprep.subr.mxu0 0.0
        %1117 = vmatpush1.xpose.msra.mxu0 0.0
        %1118 = vmatprep.subr.mxu0 0.0
        %1119 = vmatpush1.xpose.msra.mxu0 0.0
        %1120 = vmatprep.subr.mxu0 0.0
        %1121 = vmatpush1.xpose.msra.mxu0 0.0
        %1122 = vmatprep.subr.mxu0 0.0
        %1123 = vmatpush1.xpose.msra.mxu0 0.0
        %1124 = vmatprep.subr.mxu0 0.0
        %1125 = vmatpush1.xpose.msra.mxu0 %v1092
        %1126 = vmatprep.subr.mxu0 0.0
        %1127 = vmatpush2.xpose.msra.mxu0 0.0
        %1128 = vmatprep.subr.mxu0 0.0
        %1129 = vmatpush2.xpose.msra.mxu0 0.0
        %1130 = vmatprep.subr.mxu0 0.0
        %1131 = vmatpush2.xpose.msra.mxu0 0.0
        %1132 = vmatprep.subr.mxu0 0.0
        %1133 = vmatpush2.xpose.msra.mxu0 0.0
        %1134 = vmatprep.subr.mxu0 0.0
        %1135 = vmatpush2.xpose.msra.mxu0 0.0
        %1136 = vmatprep.subr.mxu0 0.0
        %1137 = vmatpush2.xpose.msra.mxu0 0.0
        %1138 = vmatprep.subr.mxu0 0.0
        %1139 = vmatpush2.xpose.msra.mxu0 0.0
        %1140 = vmatprep.subr.mxu0 0.0
        %1141 = vmatpush2.xpose.msra.mxu0 0.0
        %1142 = vmatprep.subr.mxu0 0.0
        %1143 = vmatpush2.xpose.msra.mxu0 0.0
        %1144 = vmatprep.subr.mxu0 0.0
        %1145 = vmatpush2.xpose.msra.mxu0 0.0
        %1146 = vmatprep.subr.mxu0 0.0
        %1147 = vmatpush2.xpose.msra.mxu0 0.0
        %1148 = vmatprep.subr.mxu0 0.0
        %1149 = vmatpush2.xpose.msra.mxu0 0.0
        %1150 = vmatprep.subr.mxu0 0.0
        %1151 = vmatpush2.xpose.msra.mxu0 0.0
        %1152 = vmatprep.subr.mxu0 0.0
        %1153 = vmatpush2.xpose.msra.mxu0 0.0
        %1154 = vmatprep.subr.mxu0 0.0
        %1155 = vmatpush2.xpose.msra.mxu0 0.0
        %1156 = vmatprep.subr.mxu0 0.0
        %1157 = vmatpush2.xpose.msra.mxu0 0.0
        %1158 = vmatprep.mubr.f32.mxu0 0.0
        %1159 = vmatmul.mubr.f32.gmra.mxu0 %v1090
        %v1160 = vpop.f32.mrf.mxu0
        %v1161 = vadd.f32 0.0, %v1160
        %v1162 = vpop.f32.mrf.mxu0
        %1163 = vdwg.mxu0
        %v1164 = vsel %vm746, %v1161, -inf
        %1165 = vmax.xlane.f32.xlu0 %v1164
        %v1166 = vpop.xlane.xlu0 %1165
        %v1167 = vsub.f32 %v1161, %v1166
        %v1168 = vmul.f32 %v1167, 1.442695
        %v1169 = vpow.pop %v1168
        %v1170 = vsel %vm746, %v1169, 0.0
        %1171 = vadd.xlane.f32.xlu0 %v1170
        %v1172 = vpop.xlane.xlu0 %1171
        %1174 = vrot.lane.b32.xlu0 %v1084, 112
        %v1175 = vpop.permute.xlu0 %1174
        %v1178 = vsel %vm746, %v1169, 0
        %1180 = vmatprep.subr.mxu0 0.0
        %1181 = vmatpush1.msra.mxu0 0.0
        %1182 = vmatprep.subr.mxu0 0.0
        %1183 = vmatpush1.msra.mxu0 0.0
        %1184 = vmatprep.subr.mxu0 0.0
        %1185 = vmatpush1.msra.mxu0 0.0
        %1186 = vmatprep.subr.mxu0 0.0
        %1187 = vmatpush1.msra.mxu0 0.0
        %1188 = vmatprep.subr.mxu0 0.0
        %1189 = vmatpush1.msra.mxu0 0.0
        %1190 = vmatprep.subr.mxu0 0.0
        %1191 = vmatpush1.msra.mxu0 0.0
        %1192 = vmatprep.subr.mxu0 0.0
        %1193 = vmatpush1.msra.mxu0 0.0
        %1194 = vmatprep.subr.mxu0 0.0
        %1195 = vmatpush1.msra.mxu0 0.0
        %1196 = vmatprep.subr.mxu0 0.0
        %1197 = vmatpush1.msra.mxu0 0.0
        %1198 = vmatprep.subr.mxu0 0.0
        %1199 = vmatpush1.msra.mxu0 0.0
        %1200 = vmatprep.subr.mxu0 0.0
        %1201 = vmatpush1.msra.mxu0 0.0
        %1202 = vmatprep.subr.mxu0 0.0
        %1203 = vmatpush1.msra.mxu0 0.0
        %1204 = vmatprep.subr.mxu0 0.0
        %1205 = vmatpush1.msra.mxu0 0.0
        %1206 = vmatprep.subr.mxu0 0.0
        %1207 = vmatpush1.msra.mxu0 0.0
        %1208 = vmatprep.subr.mxu0 0.0
        %1209 = vmatpush1.msra.mxu0 0.0
        %1210 = vmatprep.subr.mxu0 0.0
        %1211 = vmatpush1.msra.mxu0 %v1175
        %1212 = vmatprep.subr.mxu0 0.0
        %1213 = vmatpush2.msra.mxu0 0.0
        %1214 = vmatprep.subr.mxu0 0.0
        %1215 = vmatpush2.msra.mxu0 0.0
        %1216 = vmatprep.subr.mxu0 0.0
        %1217 = vmatpush2.msra.mxu0 0.0
        %1218 = vmatprep.subr.mxu0 0.0
        %1219 = vmatpush2.msra.mxu0 0.0
        %1220 = vmatprep.subr.mxu0 0.0
        %1221 = vmatpush2.msra.mxu0 0.0
        %1222 = vmatprep.subr.mxu0 0.0
        %1223 = vmatpush2.msra.mxu0 0.0
        %1224 = vmatprep.subr.mxu0 0.0
        %1225 = vmatpush2.msra.mxu0 0.0
        %1226 = vmatprep.subr.mxu0 0.0
        %1227 = vmatpush2.msra.mxu0 0.0
        %1228 = vmatprep.subr.mxu0 0.0
        %1229 = vmatpush2.msra.mxu0 0.0
        %1230 = vmatprep.subr.mxu0 0.0
        %1231 = vmatpush2.msra.mxu0 0.0
        %1232 = vmatprep.subr.mxu0 0.0
        %1233 = vmatpush2.msra.mxu0 0.0
        %1234 = vmatprep.subr.mxu0 0.0
        %1235 = vmatpush2.msra.mxu0 0.0
        %1236 = vmatprep.subr.mxu0 0.0
        %1237 = vmatpush2.msra.mxu0 0.0
        %1238 = vmatprep.subr.mxu0 0.0
        %1239 = vmatpush2.msra.mxu0 0.0
        %1240 = vmatprep.subr.mxu0 0.0
        %1241 = vmatpush2.msra.mxu0 0.0
        %1242 = vmatprep.subr.mxu0 0.0
        %1243 = vmatpush2.msra.mxu0 0.0
        %1244 = vmatprep.mubr.f32.mxu0 0.0
        %1245 = vmatmul.mubr.f32.gmra.mxu0 %v1178
        %v1246 = vpop.f32.mrf.mxu0
        %v1247 = vadd.f32 0.0, %v1246
        %v1248 = vpop.f32.mrf.mxu0
        %1249 = vdwg.mxu0
        %v1250 = vrcp.pop %v1172
        %v1251 = vmul.f32 %v1247, %v1250
        %1253 = vrot.lane.b32.xlu0 %v1251, 16
        %v1254 = vpop.permute.xlu0 %1253
        %vm1256 = vcmask 195712
        %1257 = vst.msk [vmem:[%s479] sm:$0xff] %vm1256, %v1254
        %v1258 = vld [vmem:[#allocation2] sm:$0xff]
        %v1259 = vld [vmem:[#allocation3] sm:$0xff]
        %1260 = vrot.lane.b32.xlu0 %v743, 104
        %v1261 = vpop.permute.xlu0 %1260
        %1263 = vrot.lane.b32.xlu0 %v1258, 104
        %v1264 = vpop.permute.xlu0 %1263
        %v1265 = vsel %vm746, %v1261, 0
        %v1267 = vsel %vm746, %v1264, 0
        %1269 = vmatprep.subr.mxu0 0.0
        %1270 = vmatpush1.xpose.msra.mxu0 0.0
        %1271 = vmatprep.subr.mxu0 0.0
        %1272 = vmatpush1.xpose.msra.mxu0 0.0
        %1273 = vmatprep.subr.mxu0 0.0
        %1274 = vmatpush1.xpose.msra.mxu0 0.0
        %1275 = vmatprep.subr.mxu0 0.0
        %1276 = vmatpush1.xpose.msra.mxu0 0.0
        %1277 = vmatprep.subr.mxu0 0.0
        %1278 = vmatpush1.xpose.msra.mxu0 0.0
        %1279 = vmatprep.subr.mxu0 0.0
        %1280 = vmatpush1.xpose.msra.mxu0 0.0
        %1281 = vmatprep.subr.mxu0 0.0
        %1282 = vmatpush1.xpose.msra.mxu0 0.0
        %1283 = vmatprep.subr.mxu0 0.0
        %1284 = vmatpush1.xpose.msra.mxu0 0.0
        %1285 = vmatprep.subr.mxu0 0.0
        %1286 = vmatpush1.xpose.msra.mxu0 0.0
        %1287 = vmatprep.subr.mxu0 0.0
        %1288 = vmatpush1.xpose.msra.mxu0 0.0
        %1289 = vmatprep.subr.mxu0 0.0
        %1290 = vmatpush1.xpose.msra.mxu0 0.0
        %1291 = vmatprep.subr.mxu0 0.0
        %1292 = vmatpush1.xpose.msra.mxu0 0.0
        %1293 = vmatprep.subr.mxu0 0.0
        %1294 = vmatpush1.xpose.msra.mxu0 0.0
        %1295 = vmatprep.subr.mxu0 0.0
        %1296 = vmatpush1.xpose.msra.mxu0 0.0
        %1297 = vmatprep.subr.mxu0 0.0
        %1298 = vmatpush1.xpose.msra.mxu0 0.0
        %1299 = vmatprep.subr.mxu0 0.0
        %1300 = vmatpush1.xpose.msra.mxu0 %v1267
        %1301 = vmatprep.subr.mxu0 0.0
        %1302 = vmatpush2.xpose.msra.mxu0 0.0
        %1303 = vmatprep.subr.mxu0 0.0
        %1304 = vmatpush2.xpose.msra.mxu0 0.0
        %1305 = vmatprep.subr.mxu0 0.0
        %1306 = vmatpush2.xpose.msra.mxu0 0.0
        %1307 = vmatprep.subr.mxu0 0.0
        %1308 = vmatpush2.xpose.msra.mxu0 0.0
        %1309 = vmatprep.subr.mxu0 0.0
        %1310 = vmatpush2.xpose.msra.mxu0 0.0
        %1311 = vmatprep.subr.mxu0 0.0
        %1312 = vmatpush2.xpose.msra.mxu0 0.0
        %1313 = vmatprep.subr.mxu0 0.0
        %1314 = vmatpush2.xpose.msra.mxu0 0.0
        %1315 = vmatprep.subr.mxu0 0.0
        %1316 = vmatpush2.xpose.msra.mxu0 0.0
        %1317 = vmatprep.subr.mxu0 0.0
        %1318 = vmatpush2.xpose.msra.mxu0 0.0
        %1319 = vmatprep.subr.mxu0 0.0
        %1320 = vmatpush2.xpose.msra.mxu0 0.0
        %1321 = vmatprep.subr.mxu0 0.0
        %1322 = vmatpush2.xpose.msra.mxu0 0.0
        %1323 = vmatprep.subr.mxu0 0.0
        %1324 = vmatpush2.xpose.msra.mxu0 0.0
        %1325 = vmatprep.subr.mxu0 0.0
        %1326 = vmatpush2.xpose.msra.mxu0 0.0
        %1327 = vmatprep.subr.mxu0 0.0
        %1328 = vmatpush2.xpose.msra.mxu0 0.0
        %1329 = vmatprep.subr.mxu0 0.0
        %1330 = vmatpush2.xpose.msra.mxu0 0.0
        %1331 = vmatprep.subr.mxu0 0.0
        %1332 = vmatpush2.xpose.msra.mxu0 0.0
        %1333 = vmatprep.mubr.f32.mxu0 0.0
        %1334 = vmatmul.mubr.f32.gmra.mxu0 %v1265
        %v1335 = vpop.f32.mrf.mxu0
        %v1336 = vadd.f32 0.0, %v1335
        %v1337 = vpop.f32.mrf.mxu0
        %1338 = vdwg.mxu0
        %v1339 = vsel %vm746, %v1336, -inf
        %1340 = vmax.xlane.f32.xlu0 %v1339
        %v1341 = vpop.xlane.xlu0 %1340
        %v1342 = vsub.f32 %v1336, %v1341
        %v1343 = vmul.f32 %v1342, 1.442695
        %v1344 = vpow.pop %v1343
        %v1345 = vsel %vm746, %v1344, 0.0
        %1346 = vadd.xlane.f32.xlu0 %v1345
        %v1347 = vpop.xlane.xlu0 %1346
        %1349 = vrot.lane.b32.xlu0 %v1259, 104
        %v1350 = vpop.permute.xlu0 %1349
        %v1353 = vsel %vm746, %v1344, 0
        %1355 = vmatprep.subr.mxu0 0.0
        %1356 = vmatpush1.msra.mxu0 0.0
        %1357 = vmatprep.subr.mxu0 0.0
        %1358 = vmatpush1.msra.mxu0 0.0
        %1359 = vmatprep.subr.mxu0 0.0
        %1360 = vmatpush1.msra.mxu0 0.0
        %1361 = vmatprep.subr.mxu0 0.0
        %1362 = vmatpush1.msra.mxu0 0.0
        %1363 = vmatprep.subr.mxu0 0.0
        %1364 = vmatpush1.msra.mxu0 0.0
        %1365 = vmatprep.subr.mxu0 0.0
        %1366 = vmatpush1.msra.mxu0 0.0
        %1367 = vmatprep.subr.mxu0 0.0
        %1368 = vmatpush1.msra.mxu0 0.0
        %1369 = vmatprep.subr.mxu0 0.0
        %1370 = vmatpush1.msra.mxu0 0.0
        %1371 = vmatprep.subr.mxu0 0.0
        %1372 = vmatpush1.msra.mxu0 0.0
        %1373 = vmatprep.subr.mxu0 0.0
        %1374 = vmatpush1.msra.mxu0 0.0
        %1375 = vmatprep.subr.mxu0 0.0
        %1376 = vmatpush1.msra.mxu0 0.0
        %1377 = vmatprep.subr.mxu0 0.0
        %1378 = vmatpush1.msra.mxu0 0.0
        %1379 = vmatprep.subr.mxu0 0.0
        %1380 = vmatpush1.msra.mxu0 0.0
        %1381 = vmatprep.subr.mxu0 0.0
        %1382 = vmatpush1.msra.mxu0 0.0
        %1383 = vmatprep.subr.mxu0 0.0
        %1384 = vmatpush1.msra.mxu0 0.0
        %1385 = vmatprep.subr.mxu0 0.0
        %1386 = vmatpush1.msra.mxu0 %v1350
        %1387 = vmatprep.subr.mxu0 0.0
        %1388 = vmatpush2.msra.mxu0 0.0
        %1389 = vmatprep.subr.mxu0 0.0
        %1390 = vmatpush2.msra.mxu0 0.0
        %1391 = vmatprep.subr.mxu0 0.0
        %1392 = vmatpush2.msra.mxu0 0.0
        %1393 = vmatprep.subr.mxu0 0.0
        %1394 = vmatpush2.msra.mxu0 0.0
        %1395 = vmatprep.subr.mxu0 0.0
        %1396 = vmatpush2.msra.mxu0 0.0
        %1397 = vmatprep.subr.mxu0 0.0
        %1398 = vmatpush2.msra.mxu0 0.0
        %1399 = vmatprep.subr.mxu0 0.0
        %1400 = vmatpush2.msra.mxu0 0.0
        %1401 = vmatprep.subr.mxu0 0.0
        %1402 = vmatpush2.msra.mxu0 0.0
        %1403 = vmatprep.subr.mxu0 0.0
        %1404 = vmatpush2.msra.mxu0 0.0
        %1405 = vmatprep.subr.mxu0 0.0
        %1406 = vmatpush2.msra.mxu0 0.0
        %1407 = vmatprep.subr.mxu0 0.0
        %1408 = vmatpush2.msra.mxu0 0.0
        %1409 = vmatprep.subr.mxu0 0.0
        %1410 = vmatpush2.msra.mxu0 0.0
        %1411 = vmatprep.subr.mxu0 0.0
        %1412 = vmatpush2.msra.mxu0 0.0
        %1413 = vmatprep.subr.mxu0 0.0
        %1414 = vmatpush2.msra.mxu0 0.0
        %1415 = vmatprep.subr.mxu0 0.0
        %1416 = vmatpush2.msra.mxu0 0.0
        %1417 = vmatprep.subr.mxu0 0.0
        %1418 = vmatpush2.msra.mxu0 0.0
        %1419 = vmatprep.mubr.f32.mxu0 0.0
        %1420 = vmatmul.mubr.f32.gmra.mxu0 %v1353
        %v1421 = vpop.f32.mrf.mxu0
        %v1422 = vadd.f32 0.0, %v1421
        %v1423 = vpop.f32.mrf.mxu0
        %1424 = vdwg.mxu0
        %v1425 = vrcp.pop %v1347
        %v1426 = vmul.f32 %v1422, %v1425
        %1428 = vrot.lane.b32.xlu0 %v1426, 24
        %v1429 = vpop.permute.xlu0 %1428
        %vm1431 = vcmask 261312
        %1432 = vst.msk [vmem:[%s479] sm:$0xff] %vm1431, %v1429
        %s1433 = sand.u32 %s259, 1
        %s1434 = scalar_lea.sflag [#allocation6], %s1433
        %s1435 = sand.u32 %s259, 1
        %s1436 = smul.addr %s1435, 8
        %s1437 = scalar_lea.vmem [#allocation15], %s1436
        // Predicated region
        $region85: #{tpu_custom_call.1} parent=55 // pred_check
          %p1438 = pneg %p269
        $region86: #{tpu_custom_call.1} parent=55 // pred_check_branch
          %1440 = sbr.rel (%p1438) target = $region88
        $region87: #{tpu_custom_call.1} parent=55 // pred_region
          %s1442 = ssub.s32 128, 128
          %1443 = vsyncadd %s1434, %s1442
          %s1444 = sadd.s32 %s36, %s35
          %s1445 = smul.addr %s1444, 128
          %s1446 = scalar_lea.hbm %s9, %s1445
          %s1448 = sshll.u32 %s1437, 4
          %s1449 = int_to_ptr.vmem [resolvable:$true] %s1448
          %1451 = dma.vmem_to_hbm [thread:$0]  %s1449, 128, %s1446, %s1434
        $region88: #{tpu_custom_call.1} parent=55 // pred_fallthru
          _
      $region56: #{tpu_custom_call.1} parent=5 // pred_fallthru
        _
      %p1452 = scmp.le.s32.totalorder 2, %s26
      // Predicated region
      $region89: #{tpu_custom_call.1} parent=5 // pred_check
        %p1453 = pneg %p1452
      $region90: #{tpu_custom_call.1} parent=5 // pred_check_branch
        %1455 = sbr.rel (%p1453) target = $region92
      $region91: #{tpu_custom_call.1} parent=5 // pred_region
        %s1456 = ssub.s32 %s26, 2
        // Predicated region
        $region93: #{tpu_custom_call.1} parent=91 // pred_check
          %p1457 = pneg %p275
        $region94: #{tpu_custom_call.1} parent=91 // pred_check_branch
          %1459 = sbr.rel (%p1457) target = $region96
        $region95: #{tpu_custom_call.1} parent=91 // pred_region
          %s1460 = sand.u32 %s260, 1
          %s1461 = scalar_lea.sflag [#allocation6], %s1460
          %s1462 = sand.u32 %s260, 1
          %s1463 = smul.addr %s1462, 8
          %s1464 = scalar_lea.vmem [#allocation15], %s1463
          %1465 = dma.done %s1461, 128
        $region96: #{tpu_custom_call.1} parent=91 // pred_fallthru
          _
      $region92: #{tpu_custom_call.1} parent=5 // pred_fallthru
        _
    $region6: #{tpu_custom_call.1} parent=1 // loop_footer
      %s30 = sadd.s32 1, %s26
    $region7: #{tpu_custom_call.1} parent=1 // loop_footer_branch
      %25 = sbr.rel target = $region3
    $region8: #{tpu_custom_call.1} parent=1 // loop_exit
      _
    %1466 = vsyncpa [#allocation5], 1
    %s1467 = scalar_lea.sflag [#allocation5], 1
    %1468 = vsyncpa %s1467, 1
    %1469 = vsyncpa [#allocation8], 1
    %s1470 = scalar_lea.sflag [#allocation8], 1
    %1471 = vsyncpa %s1470, 1
    %1472 = vsyncpa [#allocation11], 1
    %1473 = vsyncpa [#allocation14], 1
    %1474 = vsyncpa [#allocation6], 1
    %s1475 = scalar_lea.sflag [#allocation6], 1
    %1476 = vsyncpa %s1475, 1

</llo_original>
